<compile_context>
chip_gen: v7x
topology: tpu7x:2x2x1
jax: 0.10.0
libtpu: 0.0.40
codegen_flags: <defaults>
</compile_context>

<pallas_src>
import math
from functools import partial

import jax
import jax.numpy as jnp
from jax.experimental import pallas as pl
from jax.experimental.pallas import tpu as pltpu


# ----------------------------- in-kernel helpers -----------------------------

def _layer_norm(x, w, b, eps=1e-5):
    """F.layer_norm over the last dim (population variance, eps=1e-5)."""
    mu = jnp.mean(x, axis=-1, keepdims=True)
    var = jnp.mean((x - mu) ** 2, axis=-1, keepdims=True)
    return (x - mu) * jax.lax.rsqrt(var + eps) * w + b


def _erf(x):
    # fp32-accurate erf (Abramowitz & Stegun 7.1.26, |err| < 1.5e-7): keeps the
    # exact (erf-based) nn.GELU() semantics.  The rational term uses the EUP
    # approximate reciprocal so the divide does not burn VALU bundles.
    a1, a2, a3, a4, a5 = (0.254829592, -0.284496736, 1.421413741,
                          -1.453152027, 1.061405429)
    p = 0.3275911
    s = jnp.where(x < 0.0, -1.0, 1.0)
    z = jnp.abs(x)
    t = pl.reciprocal(1.0 + p * z, approx=True)
    poly = ((((a5 * t + a4) * t + a3) * t + a2) * t + a1) * t
    return s * (1.0 - poly * jnp.exp(-z * z))


def _gelu_exact(x):
    # nn.GELU() default: 0.5 * x * (1 + erf(x / sqrt(2)))
    return 0.5 * x * (1.0 + _erf(x * (1.0 / math.sqrt(2.0))))


# --------------------------------- fused kernel -------------------------------

def _fused_kernel(x_ref, lnf_ref, sm_ref, bqkv_ref, bfc1_ref,
                  wqkv_ref, wo_ref, wfc1_ref, wfc2_ref,
                  o_ref, x_acc, qkv_buf, ctx_buf, *, n_head, seq):
    """grid = (batch_tile, layer).

    NOTE: the layer axis MUST stay the innermost, sequentially-iterated
    ("arbitrary") grid axis -- x_acc carries the activation across it.
    """
    layer = pl.program_id(1)
    n_layers = pl.num_programs(1)

    M, E = x_acc.shape                     # M = Bt * S
    bt = M // seq
    dh = E // n_head

    @pl.when(layer == 0)
    def _():
        x_acc[...] = x_ref[...].astype(jnp.float32)

    x = x_acc[...]                                            # (M, E) fp32 residual

    # consolidated small per-layer params: rows = ln1_w, ln1_b, ln2_w, ln2_b, b_o, b_fc2
    ln1_w, ln1_b = sm_ref[0, 0], sm_ref[0, 1]
    ln2_w, ln2_b = sm_ref[0, 2], sm_ref[0, 3]
    b_o, b_fc2 = sm_ref[0, 4], sm_ref[0, 5]

    # ---- attention branch: x + out_proj(MHA(ln1(x), ln1(x), ln1(x))) ----
    xn = _layer_norm(x, ln1_w, ln1_b)
    # one wide bf16 (M, E) @ (E, 3E) matmul for Q|K|V of all heads
    # (1/sqrt(dh) is folded into the Q columns / Q bias at pack time).
    qkv_buf[...] = (jnp.dot(xn.astype(jnp.bfloat16), wqkv_ref[0],
                            preferred_element_type=jnp.float32)
                    + bqkv_ref[0, 0])

    # per-head attention on static lane slices of the QKV buffer; each head's
    # context is written back at its concat offset so the out-projection below
    # is a single wide matmul (head reduction fused into the MXU).
    for h in range(n_head):
        q_h = qkv_buf[:, h * dh:(h + 1) * dh].reshape(bt, seq, dh)
        k_h = qkv_buf[:, E + h * dh:E + (h + 1) * dh].reshape(bt, seq, dh)
        v_h = qkv_buf[:, 2 * E + h * dh:2 * E + (h + 1) * dh].reshape(bt, seq, dh)
        s = jnp.einsum('bqd,bkd->bqk', q_h, k_h,
                       preferred_element_type=jnp.float32)        # (bt, S, S)
        s = s - jnp.max(s, axis=-1, keepdims=True)
        p = jnp.exp(s)
        p = p * pl.reciprocal(jnp.sum(p, axis=-1, keepdims=True), approx=True)
        ctx = jnp.einsum('bqk,bkd->bqd', p, v_h,
                         preferred_element_type=jnp.float32)       # (bt, S, dh)
        ctx_buf[:, h * dh:(h + 1) * dh] = ctx.reshape(M, dh)

    attn = jnp.dot(ctx_buf[...].astype(jnp.bfloat16), wo_ref[0],
                   preferred_element_type=jnp.float32) + b_o
    x = x + attn

    # ---- MLP branch: x + fc2(gelu(fc1(ln2(x)))) ----  (Dropout = identity)
    # TODO(synk): at production n_embd on v7x (64 MiB VMEM), tile w_fc1/w_fc2
    # over the 4E hidden dim (extra grid axis or pltpu.emit_pipeline K-chunks).
    xn2 = _layer_norm(x, ln2_w, ln2_b)
    h1 = jnp.dot(xn2.astype(jnp.bfloat16), wfc1_ref[0],
                 preferred_element_type=jnp.float32) + bfc1_ref[0, 0]
    h1 = _gelu_exact(h1)
    h2 = jnp.dot(h1.astype(jnp.bfloat16), wfc2_ref[0],
                 preferred_element_type=jnp.float32) + b_fc2
    x = x + h2

    x_acc[...] = x

    # final LayerNorm fused into the last layer step.
    @pl.when(layer == n_layers - 1)
    def _():
        o_ref[...] = _layer_norm(x, lnf_ref[0], lnf_ref[1]).astype(o_ref.dtype)


# ------------------------------ VMEM budgeting --------------------------------

def _pad_to(n, m):
    return -(-int(n) // m) * m


def _padded_block_bytes(shape, itemsize):
    shape = tuple(int(d) for d in shape)
    if len(shape) == 1:
        shape = (1,) + shape
    lead = 1
    for d in shape[:-2]:
        lead *= d
    sub = 8 if itemsize >= 4 else (16 if itemsize == 2 else 32)
    return lead * _pad_to(shape[-2], sub) * _pad_to(shape[-1], 128) * itemsize


def _vmem_limit_bytes(packed, bt, S, E, n_head):
    M = bt * S
    per_layer_keys = ('small', 'b_qkv', 'b_fc1', 'w_qkv', 'w_o', 'w_fc1', 'w_fc2')
    per_layer = sum(_padded_block_bytes(packed[k].shape[1:], packed[k].dtype.itemsize)
                    for k in per_layer_keys)
    resident = (_padded_block_bytes(packed['lnf'].shape, 4)
                + 2 * _padded_block_bytes((M, E), 4))               # x-in + out blocks
    scratch = (2 * _padded_block_bytes((M, E), 4)                   # x_acc, ctx_buf
               + _padded_block_bytes((M, 3 * E), 4))                # qkv_buf
    inter = (2 * _padded_block_bytes((M, 4 * E), 4)                 # fc1 hidden + gelu temps
             + _padded_block_bytes((M, 3 * E), 4)
             + 6 * _padded_block_bytes((M, E), 4)
             + 4 * n_head * _padded_block_bytes((bt, S, S), 4))
    need = 2 * per_layer + 2 * resident + scratch + inter + (2 << 20)
    try:
        cap = int(pltpu.get_tpu_info().vmem_capacity_bytes)
    except Exception:
        cap = 64 << 20                       # v7x-safe fallback
    return int(min(max(need, 16 << 20), (cap * 3) // 4))


# ------------------------------ pallas wrapper ---------------------------------

def _pick_batch_tile(B, S):
    # Fill the MXU M dim (Bt*S >= ~128) but keep >= 2 batch tiles when B allows
    # so v7x's two TensorCores both get work; require B % Bt == 0.
    target = max(1, -(-128 // S))
    bt = min(B, target)
    if B >= 2:
        bt = min(bt, max(1, B // 2))
    while B % bt:
        bt -= 1
    return max(bt, 1)


def latent_transformer_forward(x, packed, *, n_head):
    B, S, E = x.shape
    assert E % n_head == 0
    L = packed['w_qkv'].shape[0]
    bt = _pick_batch_tile(B, S)
    M = bt * S

    # Lane-dense 2-D presentation of activations: fold (B, S) into the sublane
    # dim so every layer matmul runs on a (Bt*S, E) slab.
    # TODO(synk): at production sizes also pad/choose E, dh as multiples of 128
    # for fully lane-dense tiles.
    x2 = x.reshape(B * S, E)

    def layer_spec(a):
        nd = a.ndim
        return pl.BlockSpec((1,) + tuple(a.shape[1:]),
                            lambda bi, l, _n=nd: (l,) + (0,) * (_n - 1))
    # TODO(synk): if weight DMA is still exposed after bf16 + batch folding, add
    # pipeline_mode=pl.Buffered(3) on the large weight BlockSpecs (VMEM allowing).

    in_specs = [
        pl.BlockSpec((M, E), lambda bi, l: (bi, 0)),                 # activations
        pl.BlockSpec((2, E), lambda bi, l: (0, 0)),                  # ln_f params
        layer_spec(packed['small']),                                 # (1, 6, E)
        layer_spec(packed['b_qkv']),                                 # (1, 1, 3E)
        layer_spec(packed['b_fc1']),                                 # (1, 1, 4E)
        layer_spec(packed['w_qkv']),                                 # (1, E, 3E) bf16
        layer_spec(packed['w_o']),                                   # (1, E, E)  bf16
        layer_spec(packed['w_fc1']),                                 # (1, E, 4E) bf16
        layer_spec(packed['w_fc2']),                                 # (1, 4E, E) bf16
    ]

    vmem_limit = _vmem_limit_bytes(packed, bt, S, E, n_head)

    out2 = pl.pallas_call(
        partial(_fused_kernel, n_head=n_head, seq=S),
        out_shape=jax.ShapeDtypeStruct((B * S, E), x.dtype),
        grid=(B // bt, L),
        in_specs=in_specs,
        out_specs=pl.BlockSpec((M, E), lambda bi, l: (bi, 0)),
        scratch_shapes=[pltpu.VMEM((M, E), jnp.float32),      # x_acc (residual carry)
                        pltpu.VMEM((M, 3 * E), jnp.float32),  # qkv buffer
                        pltpu.VMEM((M, E), jnp.float32)],     # head-concat buffer
        compiler_params=pltpu.CompilerParams(
            dimension_semantics=("parallel", "arbitrary"),
            vmem_limit_bytes=vmem_limit),
    )(x2, packed['lnf'], packed['small'], packed['b_qkv'], packed['b_fc1'],
      packed['w_qkv'], packed['w_o'], packed['w_fc1'], packed['w_fc2'])

    return out2.reshape(B, S, E)


# ------------------------------ parameter setup --------------------------------

def init_torch_params(key, n_embd, n_head, n_layers):
    """Deterministic synthetic params in the PyTorch module's native layouts."""
    E = n_embd

    def nrm(k, shape, scale=0.02):
        return scale * jax.random.normal(k, shape, jnp.float32)

    layers = []
    for i in range(n_layers):
        ks = jax.random.split(jax.random.fold_in(key, i), 8)
        layers.append(dict(
            ln1_w=jnp.ones((E,), jnp.float32), ln1_b=jnp.zeros((E,), jnp.float32),
            in_proj_weight=nrm(ks[0], (3 * E, E)),     # (3E, E)
            in_proj_bias=nrm(ks[1], (3 * E,)),
            out_proj_weight=nrm(ks[2], (E, E)),        # (E, E)
            out_proj_bias=nrm(ks[3], (E,)),
            ln2_w=jnp.ones((E,), jnp.float32), ln2_b=jnp.zeros((E,), jnp.float32),
            fc1_weight=nrm(ks[4], (4 * E, E)), fc1_bias=nrm(ks[5], (4 * E,)),
            fc2_weight=nrm(ks[6], (E, 4 * E)), fc2_bias=nrm(ks[7], (E,)),
        ))
    lnf_w = jnp.ones((E,), jnp.float32)
    lnf_b = jnp.zeros((E,), jnp.float32)
    return layers, lnf_w, lnf_b


def pack_params(layers, lnf_w, lnf_b, n_head):
    """Stack per-layer params along a leading layer axis.

    Large weight matrices -> bf16, pre-transposed for right-multiplication;
    the 1/sqrt(head_dim) scale is folded into the Q columns / Q bias; the tiny
    per-layer vectors are consolidated into a single (L, 6, E) array.
    """
    E = lnf_w.shape[0]
    dh = E // n_head
    scale = 1.0 / math.sqrt(dh)
    wdt = jnp.bfloat16
    qscale = jnp.concatenate([jnp.full((E,), scale, jnp.float32),
                              jnp.ones((2 * E,), jnp.float32)])

    def stack(fn, dtype=jnp.float32):
        return jnp.stack([fn(p) for p in layers], axis=0).astype(dtype)

    return dict(
        small=stack(lambda p: jnp.stack([p['ln1_w'], p['ln1_b'],
                                         p['ln2_w'], p['ln2_b'],
                                         p['out_proj_bias'], p['fc2_bias']],
                                        axis=0)),                       # (L, 6, E)
        b_qkv=stack(lambda p: (p['in_proj_bias'] * qscale).reshape(1, 3 * E)),
        b_fc1=stack(lambda p: p['fc1_bias'].reshape(1, 4 * E)),
        w_qkv=stack(lambda p: p['in_proj_weight'].T * qscale[None, :], wdt),  # (L, E, 3E)
        w_o=stack(lambda p: p['out_proj_weight'].T, wdt),                     # (L, E, E)
        w_fc1=stack(lambda p: p['fc1_weight'].T, wdt),                        # (L, E, 4E)
        w_fc2=stack(lambda p: p['fc2_weight'].T, wdt),                        # (L, 4E, E)
        lnf=jnp.stack([lnf_w, lnf_b], axis=0),                                # (2, E)
    )


# ---------------------------- pure-JAX reference -------------------------------

def reference_forward(x, layers, lnf_w, lnf_b, n_head):
    E = x.shape[-1]
    dh = E // n_head

    def ln(y, w, b):
        mu = y.mean(-1, keepdims=True)
        var = ((y - mu) ** 2).mean(-1, keepdims=True)
        return (y - mu) / jnp.sqrt(var + 1e-5) * w + b

    B, S, _ = x.shape
    for p in layers:
        xn = ln(x, p['ln1_w'], p['ln1_b'])
        qkv = xn @ p['in_proj_weight'].T + p['in_proj_bias']
        q, k, v = jnp.split(qkv, 3, axis=-1)
        q = q.reshape(B, S, n_head, dh).transpose(0, 2, 1, 3) / math.sqrt(dh)
        k = k.reshape(B, S, n_head, dh).transpose(0, 2, 1, 3)
        v = v.reshape(B, S, n_head, dh).transpose(0, 2, 1, 3)
        att = jax.nn.softmax(q @ k.transpose(0, 1, 3, 2), axis=-1)
        ctx = (att @ v).transpose(0, 2, 1, 3).reshape(B, S, E)
        x = x + ctx @ p['out_proj_weight'].T + p['out_proj_bias']
        xn2 = ln(x, p['ln2_w'], p['ln2_b'])
        h = xn2 @ p['fc1_weight'].T + p['fc1_bias']
        h = jax.nn.gelu(h, approximate=False)
        x = x + h @ p['fc2_weight'].T + p['fc2_bias']
    return ln(x, lnf_w, lnf_b)


# ----------------------------------- main --------------------------------------

if __name__ == "__main__":
    n_embd, n_head, n_layers, dropout = 32, 4, 2, 0.0
    B, S = 2, 8

    key = jax.random.PRNGKey(0)
    kx, kp = jax.random.split(key)
    x = jax.random.normal(kx, (B, S, n_embd), jnp.float32)

    layers, lnf_w, lnf_b = init_torch_params(kp, n_embd, n_head, n_layers)
    packed = pack_params(layers, lnf_w, lnf_b, n_head)

    fwd = jax.jit(partial(latent_transformer_forward, n_head=n_head))
    out = fwd(x, packed)
    jax.block_until_ready(out)

    assert out.shape == (B, S, n_embd) and out.dtype == jnp.float32
    ref = reference_forward(x, layers, lnf_w, lnf_b, n_head)
    err = float(jnp.max(jnp.abs(out - ref)))
    assert err < 3e-2, f"kernel deviates from reference: max|diff|={err}"
    print("KERNEL_OK")
</pallas_src>

<mosaic_0001>
module attributes {stable_mosaic.version = 11 : i64} {
  func.func @_fused_kernel(%arg0: i32, %arg1: i32, %arg2: memref<8x32xf32, #tpu.memory_space<vmem>>, %arg3: memref<2x32xf32, #tpu.memory_space<vmem>>, %arg4: memref<1x6x32xf32, #tpu.memory_space<vmem>>, %arg5: memref<1x1x96xf32, #tpu.memory_space<vmem>>, %arg6: memref<1x1x128xf32, #tpu.memory_space<vmem>>, %arg7: memref<1x32x96xbf16, #tpu.memory_space<vmem>>, %arg8: memref<1x32x32xbf16, #tpu.memory_space<vmem>>, %arg9: memref<1x32x128xbf16, #tpu.memory_space<vmem>>, %arg10: memref<1x128x32xbf16, #tpu.memory_space<vmem>>, %arg11: memref<8x32xf32, #tpu.memory_space<vmem>>, %arg12: memref<8x32xf32, #tpu.memory_space<vmem>>, %arg13: memref<8x96xf32, #tpu.memory_space<vmem>>, %arg14: memref<8x32xf32, #tpu.memory_space<vmem>>) attributes {dimension_semantics = [#tpu.dimension_semantics<parallel>, #tpu.dimension_semantics<arbitrary>], iteration_bounds = array<i64: 2, 2>, scalar_prefetch = 0 : i64, scratch_operands = 3 : i64, tpu.core_type = #tpu.core_type<tc>, window_params = [{transform_indices = @transform_0, window_bounds = array<i64: 8, 32>}, {pipeline_mode = #tpu.pipeline_mode<synchronous>, transform_indices = @transform_1, window_bounds = array<i64: 2, 32>}, {transform_indices = @transform_2, window_bounds = array<i64: 1, 6, 32>}, {transform_indices = @transform_3, window_bounds = array<i64: 1, 1, 96>}, {transform_indices = @transform_4, window_bounds = array<i64: 1, 1, 128>}, {transform_indices = @transform_5, window_bounds = array<i64: 1, 32, 96>}, {transform_indices = @transform_6, window_bounds = array<i64: 1, 32, 32>}, {transform_indices = @transform_7, window_bounds = array<i64: 1, 32, 128>}, {transform_indices = @transform_8, window_bounds = array<i64: 1, 128, 32>}, {transform_indices = @transform_9, window_bounds = array<i64: 8, 32>}]} {
    %c0_i32 = arith.constant 0 : i32
    %0 = arith.cmpi eq, %arg1, %c0_i32 : i32
    %1 = arith.extui %0 : i1 to i32
    %c0_i32_0 = arith.constant 0 : i32
    %2 = arith.cmpi ne, %1, %c0_i32_0 : i32
    scf.if %2 {
      %c0_105 = arith.constant 0 : index
      %c0_106 = arith.constant 0 : index
      %224 = vector.load %arg2[%c0_105, %c0_106] : memref<8x32xf32, #tpu.memory_space<vmem>>, vector<8x32xf32>
      %c0_107 = arith.constant 0 : index
      %c0_108 = arith.constant 0 : index
      %225 = vector.load %arg12[%c0_107, %c0_108] : memref<8x32xf32, #tpu.memory_space<vmem>>, vector<8x32xf32>
      tpu.vector_store %arg12[%c0_107, %c0_108], %224 {strides = array<i32>} : memref<8x32xf32, #tpu.memory_space<vmem>>, vector<8x32xf32>,
    } else {
    }
    %c0 = arith.constant 0 : index
    %c0_1 = arith.constant 0 : index
    %3 = vector.load %arg12[%c0, %c0_1] : memref<8x32xf32, #tpu.memory_space<vmem>>, vector<8x32xf32>
    %c0_2 = arith.constant 0 : index
    %c0_3 = arith.constant 0 : index
    %c0_4 = arith.constant 0 : index
    %4 = vector.load %arg4[%c0_2, %c0_3, %c0_4] : memref<1x6x32xf32, #tpu.memory_space<vmem>>, vector<1x1x32xf32>
    %5 = vector.shape_cast %4 : vector<1x1x32xf32> to vector<32xf32>
    %c0_5 = arith.constant 0 : index
    %c1 = arith.constant 1 : index
    %c0_6 = arith.constant 0 : index
    %6 = vector.load %arg4[%c0_5, %c1, %c0_6] : memref<1x6x32xf32, #tpu.memory_space<vmem>>, vector<1x1x32xf32>
    %7 = vector.shape_cast %6 : vector<1x1x32xf32> to vector<32xf32>
    %c0_7 = arith.constant 0 : index
    %c2 = arith.constant 2 : index
    %c0_8 = arith.constant 0 : index
    %8 = vector.load %arg4[%c0_7, %c2, %c0_8] : memref<1x6x32xf32, #tpu.memory_space<vmem>>, vector<1x1x32xf32>
    %9 = vector.shape_cast %8 : vector<1x1x32xf32> to vector<32xf32>
    %c0_9 = arith.constant 0 : index
    %c3 = arith.constant 3 : index
    %c0_10 = arith.constant 0 : index
    %10 = vector.load %arg4[%c0_9, %c3, %c0_10] : memref<1x6x32xf32, #tpu.memory_space<vmem>>, vector<1x1x32xf32>
    %11 = vector.shape_cast %10 : vector<1x1x32xf32> to vector<32xf32>
    %c0_11 = arith.constant 0 : index
    %c4 = arith.constant 4 : index
    %c0_12 = arith.constant 0 : index
    %12 = vector.load %arg4[%c0_11, %c4, %c0_12] : memref<1x6x32xf32, #tpu.memory_space<vmem>>, vector<1x1x32xf32>
    %13 = vector.shape_cast %12 : vector<1x1x32xf32> to vector<32xf32>
    %c0_13 = arith.constant 0 : index
    %c5 = arith.constant 5 : index
    %c0_14 = arith.constant 0 : index
    %14 = vector.load %arg4[%c0_13, %c5, %c0_14] : memref<1x6x32xf32, #tpu.memory_space<vmem>>, vector<1x1x32xf32>
    %15 = vector.shape_cast %14 : vector<1x1x32xf32> to vector<32xf32>
    %cst = arith.constant dense<0.000000e+00> : vector<8xf32>
    %16 = vector.multi_reduction <add>, %3, %cst [1] : vector<8x32xf32> to vector<8xf32>
    %17 = vector.shape_cast %16 : vector<8xf32> to vector<8x1xf32>
    %cst_15 = arith.constant 3.200000e+01 : f32
    %18 = vector.broadcast %cst_15 : f32 to vector<8x1xf32>
    %19 = arith.divf %17, %18 : vector<8x1xf32>
    %20 = vector.broadcast %19 : vector<8x1xf32> to vector<8x32xf32>
    %21 = arith.subf %3, %20 : vector<8x32xf32>
    %22 = arith.mulf %21, %21 : vector<8x32xf32>
    %cst_16 = arith.constant dense<0.000000e+00> : vector<8xf32>
    %23 = vector.multi_reduction <add>, %22, %cst_16 [1] : vector<8x32xf32> to vector<8xf32>
    %24 = vector.shape_cast %23 : vector<8xf32> to vector<8x1xf32>
    %cst_17 = arith.constant 3.200000e+01 : f32
    %25 = vector.broadcast %cst_17 : f32 to vector<8x1xf32>
    %26 = arith.divf %24, %25 : vector<8x1xf32>
    %27 = vector.broadcast %19 : vector<8x1xf32> to vector<8x32xf32>
    %28 = arith.subf %3, %27 : vector<8x32xf32>
    %cst_18 = arith.constant 9.99999974E-6 : f32
    %29 = vector.broadcast %cst_18 : f32 to vector<8x1xf32>
    %30 = arith.addf %26, %29 : vector<8x1xf32>
    %31 = math.rsqrt %30 : vector<8x1xf32>
    %32 = vector.broadcast %31 : vector<8x1xf32> to vector<8x32xf32>
    %33 = arith.mulf %28, %32 : vector<8x32xf32>
    %34 = vector.shape_cast %5 : vector<32xf32> to vector<1x32xf32>
    %35 = vector.broadcast %34 : vector<1x32xf32> to vector<8x32xf32>
    %36 = arith.mulf %33, %35 : vector<8x32xf32>
    %37 = vector.shape_cast %7 : vector<32xf32> to vector<1x32xf32>
    %38 = vector.broadcast %37 : vector<1x32xf32> to vector<8x32xf32>
    %39 = arith.addf %36, %38 : vector<8x32xf32>
    %40 = arith.truncf %39 : vector<8x32xf32> to vector<8x32xbf16>
    %c0_19 = arith.constant 0 : index
    %c0_20 = arith.constant 0 : index
    %c0_21 = arith.constant 0 : index
    %41 = vector.load %arg7[%c0_19, %c0_20, %c0_21] : memref<1x32x96xbf16, #tpu.memory_space<vmem>>, vector<1x32x96xbf16>
    %42 = vector.shape_cast %41 : vector<1x32x96xbf16> to vector<32x96xbf16>
    %cst_22 = arith.constant dense<0.000000e+00> : vector<8x96xf32>
    %43 = tpu.matmul %40, %42, %cst_22 {dimension_numbers = #tpu.dot_dimension_numbers<[1], [0], [0], [1], [0, 0, 1, 1], [], []>} : vector<8x32xbf16>, vector<32x96xbf16>, vector<8x96xf32> -> vector<8x96xf32>
    %c0_23 = arith.constant 0 : index
    %c0_24 = arith.constant 0 : index
    %c0_25 = arith.constant 0 : index
    %44 = vector.load %arg5[%c0_23, %c0_24, %c0_25] : memref<1x1x96xf32, #tpu.memory_space<vmem>>, vector<1x1x96xf32>
    %45 = vector.shape_cast %44 : vector<1x1x96xf32> to vector<96xf32>
    %46 = vector.shape_cast %45 : vector<96xf32> to vector<1x96xf32>
    %47 = vector.broadcast %46 : vector<1x96xf32> to vector<8x96xf32>
    %48 = arith.addf %43, %47 : vector<8x96xf32>
    %c0_26 = arith.constant 0 : index
    %c0_27 = arith.constant 0 : index
    %49 = vector.load %arg13[%c0_26, %c0_27] : memref<8x96xf32, #tpu.memory_space<vmem>>, vector<8x96xf32>
    tpu.vector_store %arg13[%c0_26, %c0_27], %48 {strides = array<i32>} : memref<8x96xf32, #tpu.memory_space<vmem>>, vector<8x96xf32>,
    %c0_28 = arith.constant 0 : index
    %c0_29 = arith.constant 0 : index
    %50 = vector.load %arg13[%c0_28, %c0_29] : memref<8x96xf32, #tpu.memory_space<vmem>>, vector<8x8xf32>
    %51 = vector.shape_cast %50 : vector<8x8xf32> to vector<1x8x8xf32>
    %c0_30 = arith.constant 0 : index
    %c32 = arith.constant 32 : index
    %52 = vector.load %arg13[%c0_30, %c32] : memref<8x96xf32, #tpu.memory_space<vmem>>, vector<8x8xf32>
    %53 = vector.shape_cast %52 : vector<8x8xf32> to vector<1x8x8xf32>
    %c0_31 = arith.constant 0 : index
    %c64 = arith.constant 64 : index
    %54 = vector.load %arg13[%c0_31, %c64] : memref<8x96xf32, #tpu.memory_space<vmem>>, vector<8x8xf32>
    %55 = vector.shape_cast %54 : vector<8x8xf32> to vector<1x8x8xf32>
    "tpu.trace_start"() <{level = 10 : i32, message = "bqd,bkd->bqk"}> : () -> ()
    %cst_32 = arith.constant dense<0.000000e+00> : vector<1x8x8xf32>
    %56 = tpu.matmul %51, %53, %cst_32 {dimension_numbers = #tpu.dot_dimension_numbers<[2], [2], [1], [1], [0, 0, 0, 1, 1, 1], [0], [0]>} : vector<1x8x8xf32>, vector<1x8x8xf32>, vector<1x8x8xf32> -> vector<1x8x8xf32>
    "tpu.trace_stop"() : () -> ()
    %cst_33 = arith.constant dense<0xFF800000> : vector<1x8xf32>
    %57 = vector.multi_reduction <maximumf>, %56, %cst_33 [2] : vector<1x8x8xf32> to vector<1x8xf32>
    %58 = vector.shape_cast %57 : vector<1x8xf32> to vector<1x8x1xf32>
    %59 = vector.broadcast %58 : vector<1x8x1xf32> to vector<1x8x8xf32>
    %60 = arith.subf %56, %59 : vector<1x8x8xf32>
    %61 = math.exp %60 : vector<1x8x8xf32>
    %cst_34 = arith.constant dense<0.000000e+00> : vector<1x8xf32>
    %62 = vector.multi_reduction <add>, %61, %cst_34 [2] : vector<1x8x8xf32> to vector<1x8xf32>
    %63 = vector.shape_cast %62 : vector<1x8xf32> to vector<1x8x1xf32>
    %64 = tpu.reciprocal %63 {approx = true} : vector<1x8x1xf32> -> vector<1x8x1xf32>
    %65 = vector.broadcast %64 : vector<1x8x1xf32> to vector<1x8x8xf32>
    %66 = arith.mulf %61, %65 : vector<1x8x8xf32>
    "tpu.trace_start"() <{level = 10 : i32, message = "bqk,bkd->bqd"}> : () -> ()
    %cst_35 = arith.constant dense<0.000000e+00> : vector<1x8x8xf32>
    %67 = tpu.matmul %66, %55, %cst_35 {dimension_numbers = #tpu.dot_dimension_numbers<[2], [1], [1], [2], [0, 0, 0, 1, 1, 2], [0], [0]>} : vector<1x8x8xf32>, vector<1x8x8xf32>, vector<1x8x8xf32> -> vector<1x8x8xf32>
    "tpu.trace_stop"() : () -> ()
    %68 = vector.shape_cast %67 : vector<1x8x8xf32> to vector<8x8xf32>
    %c0_36 = arith.constant 0 : index
    %c0_37 = arith.constant 0 : index
    %69 = vector.load %arg14[%c0_36, %c0_37] : memref<8x32xf32, #tpu.memory_space<vmem>>, vector<8x8xf32>
    tpu.vector_store %arg14[%c0_36, %c0_37], %68 {strides = array<i32>} : memref<8x32xf32, #tpu.memory_space<vmem>>, vector<8x8xf32>,
    %c0_38 = arith.constant 0 : index
    %c8 = arith.constant 8 : index
    %70 = vector.load %arg13[%c0_38, %c8] : memref<8x96xf32, #tpu.memory_space<vmem>>, vector<8x8xf32>
    %71 = vector.shape_cast %70 : vector<8x8xf32> to vector<1x8x8xf32>
    %c0_39 = arith.constant 0 : index
    %c40 = arith.constant 40 : index
    %72 = vector.load %arg13[%c0_39, %c40] : memref<8x96xf32, #tpu.memory_space<vmem>>, vector<8x8xf32>
    %73 = vector.shape_cast %72 : vector<8x8xf32> to vector<1x8x8xf32>
    %c0_40 = arith.constant 0 : index
    %c72 = arith.constant 72 : index
    %74 = vector.load %arg13[%c0_40, %c72] : memref<8x96xf32, #tpu.memory_space<vmem>>, vector<8x8xf32>
    %75 = vector.shape_cast %74 : vector<8x8xf32> to vector<1x8x8xf32>
    "tpu.trace_start"() <{level = 10 : i32, message = "bqd,bkd->bqk"}> : () -> ()
    %cst_41 = arith.constant dense<0.000000e+00> : vector<1x8x8xf32>
    %76 = tpu.matmul %71, %73, %cst_41 {dimension_numbers = #tpu.dot_dimension_numbers<[2], [2], [1], [1], [0, 0, 0, 1, 1, 1], [0], [0]>} : vector<1x8x8xf32>, vector<1x8x8xf32>, vector<1x8x8xf32> -> vector<1x8x8xf32>
    "tpu.trace_stop"() : () -> ()
    %cst_42 = arith.constant dense<0xFF800000> : vector<1x8xf32>
    %77 = vector.multi_reduction <maximumf>, %76, %cst_42 [2] : vector<1x8x8xf32> to vector<1x8xf32>
    %78 = vector.shape_cast %77 : vector<1x8xf32> to vector<1x8x1xf32>
    %79 = vector.broadcast %78 : vector<1x8x1xf32> to vector<1x8x8xf32>
    %80 = arith.subf %76, %79 : vector<1x8x8xf32>
    %81 = math.exp %80 : vector<1x8x8xf32>
    %cst_43 = arith.constant dense<0.000000e+00> : vector<1x8xf32>
    %82 = vector.multi_reduction <add>, %81, %cst_43 [2] : vector<1x8x8xf32> to vector<1x8xf32>
    %83 = vector.shape_cast %82 : vector<1x8xf32> to vector<1x8x1xf32>
    %84 = tpu.reciprocal %83 {approx = true} : vector<1x8x1xf32> -> vector<1x8x1xf32>
    %85 = vector.broadcast %84 : vector<1x8x1xf32> to vector<1x8x8xf32>
    %86 = arith.mulf %81, %85 : vector<1x8x8xf32>
    "tpu.trace_start"() <{level = 10 : i32, message = "bqk,bkd->bqd"}> : () -> ()
    %cst_44 = arith.constant dense<0.000000e+00> : vector<1x8x8xf32>
    %87 = tpu.matmul %86, %75, %cst_44 {dimension_numbers = #tpu.dot_dimension_numbers<[2], [1], [1], [2], [0, 0, 0, 1, 1, 2], [0], [0]>} : vector<1x8x8xf32>, vector<1x8x8xf32>, vector<1x8x8xf32> -> vector<1x8x8xf32>
    "tpu.trace_stop"() : () -> ()
    %88 = vector.shape_cast %87 : vector<1x8x8xf32> to vector<8x8xf32>
    %c0_45 = arith.constant 0 : index
    %c8_46 = arith.constant 8 : index
    %89 = vector.load %arg14[%c0_45, %c8_46] : memref<8x32xf32, #tpu.memory_space<vmem>>, vector<8x8xf32>
    tpu.vector_store %arg14[%c0_45, %c8_46], %88 {strides = array<i32>} : memref<8x32xf32, #tpu.memory_space<vmem>>, vector<8x8xf32>,
    %c0_47 = arith.constant 0 : index
    %c16 = arith.constant 16 : index
    %90 = vector.load %arg13[%c0_47, %c16] : memref<8x96xf32, #tpu.memory_space<vmem>>, vector<8x8xf32>
    %91 = vector.shape_cast %90 : vector<8x8xf32> to vector<1x8x8xf32>
    %c0_48 = arith.constant 0 : index
    %c48 = arith.constant 48 : index
    %92 = vector.load %arg13[%c0_48, %c48] : memref<8x96xf32, #tpu.memory_space<vmem>>, vector<8x8xf32>
    %93 = vector.shape_cast %92 : vector<8x8xf32> to vector<1x8x8xf32>
    %c0_49 = arith.constant 0 : index
    %c80 = arith.constant 80 : index
    %94 = vector.load %arg13[%c0_49, %c80] : memref<8x96xf32, #tpu.memory_space<vmem>>, vector<8x8xf32>
    %95 = vector.shape_cast %94 : vector<8x8xf32> to vector<1x8x8xf32>
    "tpu.trace_start"() <{level = 10 : i32, message = "bqd,bkd->bqk"}> : () -> ()
    %cst_50 = arith.constant dense<0.000000e+00> : vector<1x8x8xf32>
    %96 = tpu.matmul %91, %93, %cst_50 {dimension_numbers = #tpu.dot_dimension_numbers<[2], [2], [1], [1], [0, 0, 0, 1, 1, 1], [0], [0]>} : vector<1x8x8xf32>, vector<1x8x8xf32>, vector<1x8x8xf32> -> vector<1x8x8xf32>
    "tpu.trace_stop"() : () -> ()
    %cst_51 = arith.constant dense<0xFF800000> : vector<1x8xf32>
    %97 = vector.multi_reduction <maximumf>, %96, %cst_51 [2] : vector<1x8x8xf32> to vector<1x8xf32>
    %98 = vector.shape_cast %97 : vector<1x8xf32> to vector<1x8x1xf32>
    %99 = vector.broadcast %98 : vector<1x8x1xf32> to vector<1x8x8xf32>
    %100 = arith.subf %96, %99 : vector<1x8x8xf32>
    %101 = math.exp %100 : vector<1x8x8xf32>
    %cst_52 = arith.constant dense<0.000000e+00> : vector<1x8xf32>
    %102 = vector.multi_reduction <add>, %101, %cst_52 [2] : vector<1x8x8xf32> to vector<1x8xf32>
    %103 = vector.shape_cast %102 : vector<1x8xf32> to vector<1x8x1xf32>
    %104 = tpu.reciprocal %103 {approx = true} : vector<1x8x1xf32> -> vector<1x8x1xf32>
    %105 = vector.broadcast %104 : vector<1x8x1xf32> to vector<1x8x8xf32>
    %106 = arith.mulf %101, %105 : vector<1x8x8xf32>
    "tpu.trace_start"() <{level = 10 : i32, message = "bqk,bkd->bqd"}> : () -> ()
    %cst_53 = arith.constant dense<0.000000e+00> : vector<1x8x8xf32>
    %107 = tpu.matmul %106, %95, %cst_53 {dimension_numbers = #tpu.dot_dimension_numbers<[2], [1], [1], [2], [0, 0, 0, 1, 1, 2], [0], [0]>} : vector<1x8x8xf32>, vector<1x8x8xf32>, vector<1x8x8xf32> -> vector<1x8x8xf32>
    "tpu.trace_stop"() : () -> ()
    %108 = vector.shape_cast %107 : vector<1x8x8xf32> to vector<8x8xf32>
    %c0_54 = arith.constant 0 : index
    %c16_55 = arith.constant 16 : index
    %109 = vector.load %arg14[%c0_54, %c16_55] : memref<8x32xf32, #tpu.memory_space<vmem>>, vector<8x8xf32>
    tpu.vector_store %arg14[%c0_54, %c16_55], %108 {strides = array<i32>} : memref<8x32xf32, #tpu.memory_space<vmem>>, vector<8x8xf32>,
    %c0_56 = arith.constant 0 : index
    %c24 = arith.constant 24 : index
    %110 = vector.load %arg13[%c0_56, %c24] : memref<8x96xf32, #tpu.memory_space<vmem>>, vector<8x8xf32>
    %111 = vector.shape_cast %110 : vector<8x8xf32> to vector<1x8x8xf32>
    %c0_57 = arith.constant 0 : index
    %c56 = arith.constant 56 : index
    %112 = vector.load %arg13[%c0_57, %c56] : memref<8x96xf32, #tpu.memory_space<vmem>>, vector<8x8xf32>
    %113 = vector.shape_cast %112 : vector<8x8xf32> to vector<1x8x8xf32>
    %c0_58 = arith.constant 0 : index
    %c88 = arith.constant 88 : index
    %114 = vector.load %arg13[%c0_58, %c88] : memref<8x96xf32, #tpu.memory_space<vmem>>, vector<8x8xf32>
    %115 = vector.shape_cast %114 : vector<8x8xf32> to vector<1x8x8xf32>
    "tpu.trace_start"() <{level = 10 : i32, message = "bqd,bkd->bqk"}> : () -> ()
    %cst_59 = arith.constant dense<0.000000e+00> : vector<1x8x8xf32>
    %116 = tpu.matmul %111, %113, %cst_59 {dimension_numbers = #tpu.dot_dimension_numbers<[2], [2], [1], [1], [0, 0, 0, 1, 1, 1], [0], [0]>} : vector<1x8x8xf32>, vector<1x8x8xf32>, vector<1x8x8xf32> -> vector<1x8x8xf32>
    "tpu.trace_stop"() : () -> ()
    %cst_60 = arith.constant dense<0xFF800000> : vector<1x8xf32>
    %117 = vector.multi_reduction <maximumf>, %116, %cst_60 [2] : vector<1x8x8xf32> to vector<1x8xf32>
    %118 = vector.shape_cast %117 : vector<1x8xf32> to vector<1x8x1xf32>
    %119 = vector.broadcast %118 : vector<1x8x1xf32> to vector<1x8x8xf32>
    %120 = arith.subf %116, %119 : vector<1x8x8xf32>
    %121 = math.exp %120 : vector<1x8x8xf32>
    %cst_61 = arith.constant dense<0.000000e+00> : vector<1x8xf32>
    %122 = vector.multi_reduction <add>, %121, %cst_61 [2] : vector<1x8x8xf32> to vector<1x8xf32>
    %123 = vector.shape_cast %122 : vector<1x8xf32> to vector<1x8x1xf32>
    %124 = tpu.reciprocal %123 {approx = true} : vector<1x8x1xf32> -> vector<1x8x1xf32>
    %125 = vector.broadcast %124 : vector<1x8x1xf32> to vector<1x8x8xf32>
    %126 = arith.mulf %121, %125 : vector<1x8x8xf32>
    "tpu.trace_start"() <{level = 10 : i32, message = "bqk,bkd->bqd"}> : () -> ()
    %cst_62 = arith.constant dense<0.000000e+00> : vector<1x8x8xf32>
    %127 = tpu.matmul %126, %115, %cst_62 {dimension_numbers = #tpu.dot_dimension_numbers<[2], [1], [1], [2], [0, 0, 0, 1, 1, 2], [0], [0]>} : vector<1x8x8xf32>, vector<1x8x8xf32>, vector<1x8x8xf32> -> vector<1x8x8xf32>
    "tpu.trace_stop"() : () -> ()
    %128 = vector.shape_cast %127 : vector<1x8x8xf32> to vector<8x8xf32>
    %c0_63 = arith.constant 0 : index
    %c24_64 = arith.constant 24 : index
    %129 = vector.load %arg14[%c0_63, %c24_64] : memref<8x32xf32, #tpu.memory_space<vmem>>, vector<8x8xf32>
    tpu.vector_store %arg14[%c0_63, %c24_64], %128 {strides = array<i32>} : memref<8x32xf32, #tpu.memory_space<vmem>>, vector<8x8xf32>,
    %c0_65 = arith.constant 0 : index
    %c0_66 = arith.constant 0 : index
    %130 = vector.load %arg14[%c0_65, %c0_66] : memref<8x32xf32, #tpu.memory_space<vmem>>, vector<8x32xf32>
    %131 = arith.truncf %130 : vector<8x32xf32> to vector<8x32xbf16>
    %c0_67 = arith.constant 0 : index
    %c0_68 = arith.constant 0 : index
    %c0_69 = arith.constant 0 : index
    %132 = vector.load %arg8[%c0_67, %c0_68, %c0_69] : memref<1x32x32xbf16, #tpu.memory_space<vmem>>, vector<1x32x32xbf16>
    %133 = vector.shape_cast %132 : vector<1x32x32xbf16> to vector<32x32xbf16>
    %cst_70 = arith.constant dense<0.000000e+00> : vector<8x32xf32>
    %134 = tpu.matmul %131, %133, %cst_70 {dimension_numbers = #tpu.dot_dimension_numbers<[1], [0], [0], [1], [0, 0, 1, 1], [], []>} : vector<8x32xbf16>, vector<32x32xbf16>, vector<8x32xf32> -> vector<8x32xf32>
    %135 = vector.shape_cast %13 : vector<32xf32> to vector<1x32xf32>
    %136 = vector.broadcast %135 : vector<1x32xf32> to vector<8x32xf32>
    %137 = arith.addf %134, %136 : vector<8x32xf32>
    %138 = arith.addf %3, %137 : vector<8x32xf32>
    %cst_71 = arith.constant dense<0.000000e+00> : vector<8xf32>
    %139 = vector.multi_reduction <add>, %138, %cst_71 [1] : vector<8x32xf32> to vector<8xf32>
    %140 = vector.shape_cast %139 : vector<8xf32> to vector<8x1xf32>
    %cst_72 = arith.constant 3.200000e+01 : f32
    %141 = vector.broadcast %cst_72 : f32 to vector<8x1xf32>
    %142 = arith.divf %140, %141 : vector<8x1xf32>
    %143 = vector.broadcast %142 : vector<8x1xf32> to vector<8x32xf32>
    %144 = arith.subf %138, %143 : vector<8x32xf32>
    %145 = arith.mulf %144, %144 : vector<8x32xf32>
    %cst_73 = arith.constant dense<0.000000e+00> : vector<8xf32>
    %146 = vector.multi_reduction <add>, %145, %cst_73 [1] : vector<8x32xf32> to vector<8xf32>
    %147 = vector.shape_cast %146 : vector<8xf32> to vector<8x1xf32>
    %cst_74 = arith.constant 3.200000e+01 : f32
    %148 = vector.broadcast %cst_74 : f32 to vector<8x1xf32>
    %149 = arith.divf %147, %148 : vector<8x1xf32>
    %150 = vector.broadcast %142 : vector<8x1xf32> to vector<8x32xf32>
    %151 = arith.subf %138, %150 : vector<8x32xf32>
    %cst_75 = arith.constant 9.99999974E-6 : f32
    %152 = vector.broadcast %cst_75 : f32 to vector<8x1xf32>
    %153 = arith.addf %149, %152 : vector<8x1xf32>
    %154 = math.rsqrt %153 : vector<8x1xf32>
    %155 = vector.broadcast %154 : vector<8x1xf32> to vector<8x32xf32>
    %156 = arith.mulf %151, %155 : vector<8x32xf32>
    %157 = vector.shape_cast %9 : vector<32xf32> to vector<1x32xf32>
    %158 = vector.broadcast %157 : vector<1x32xf32> to vector<8x32xf32>
    %159 = arith.mulf %156, %158 : vector<8x32xf32>
    %160 = vector.shape_cast %11 : vector<32xf32> to vector<1x32xf32>
    %161 = vector.broadcast %160 : vector<1x32xf32> to vector<8x32xf32>
    %162 = arith.addf %159, %161 : vector<8x32xf32>
    %163 = arith.truncf %162 : vector<8x32xf32> to vector<8x32xbf16>
    %c0_76 = arith.constant 0 : index
    %c0_77 = arith.constant 0 : index
    %c0_78 = arith.constant 0 : index
    %164 = vector.load %arg9[%c0_76, %c0_77, %c0_78] : memref<1x32x128xbf16, #tpu.memory_space<vmem>>, vector<1x32x128xbf16>
    %165 = vector.shape_cast %164 : vector<1x32x128xbf16> to vector<32x128xbf16>
    %cst_79 = arith.constant dense<0.000000e+00> : vector<8x128xf32>
    %166 = tpu.matmul %163, %165, %cst_79 {dimension_numbers = #tpu.dot_dimension_numbers<[1], [0], [0], [1], [0, 0, 1, 1], [], []>} : vector<8x32xbf16>, vector<32x128xbf16>, vector<8x128xf32> -> vector<8x128xf32>
    %c0_80 = arith.constant 0 : index
    %c0_81 = arith.constant 0 : index
    %c0_82 = arith.constant 0 : index
    %167 = vector.load %arg6[%c0_80, %c0_81, %c0_82] : memref<1x1x128xf32, #tpu.memory_space<vmem>>, vector<1x1x128xf32>
    %168 = vector.shape_cast %167 : vector<1x1x128xf32> to vector<128xf32>
    %169 = vector.shape_cast %168 : vector<128xf32> to vector<1x128xf32>
    %170 = vector.broadcast %169 : vector<1x128xf32> to vector<8x128xf32>
    %171 = arith.addf %166, %170 : vector<8x128xf32>
    %cst_83 = arith.constant 5.000000e-01 : f32
    %172 = vector.broadcast %cst_83 : f32 to vector<8x128xf32>
    %173 = arith.mulf %172, %171 : vector<8x128xf32>
    %cst_84 = arith.constant 0.707106769 : f32
    %174 = vector.broadcast %cst_84 : f32 to vector<8x128xf32>
    %175 = arith.mulf %171, %174 : vector<8x128xf32>
    %cst_85 = arith.constant 0.000000e+00 : f32
    %176 = vector.broadcast %cst_85 : f32 to vector<8x128xf32>
    %177 = arith.cmpf olt, %175, %176 : vector<8x128xf32>
    %cst_86 = arith.constant -1.000000e+00 : f32
    %cst_87 = arith.constant 1.000000e+00 : f32
    %178 = vector.broadcast %cst_86 : f32 to vector<8x128xf32>
    %179 = vector.broadcast %cst_87 : f32 to vector<8x128xf32>
    %180 = arith.select %177, %178, %179 : vector<8x128xi1>, vector<8x128xf32>
    %181 = math.absf %175 : vector<8x128xf32>
    %cst_88 = arith.constant 0.327591091 : f32
    %182 = vector.broadcast %cst_88 : f32 to vector<8x128xf32>
    %183 = arith.mulf %182, %181 : vector<8x128xf32>
    %cst_89 = arith.constant 1.000000e+00 : f32
    %184 = vector.broadcast %cst_89 : f32 to vector<8x128xf32>
    %185 = arith.addf %184, %183 : vector<8x128xf32>
    %186 = tpu.reciprocal %185 {approx = true} : vector<8x128xf32> -> vector<8x128xf32>
    %cst_90 = arith.constant 1.06140542 : f32
    %187 = vector.broadcast %cst_90 : f32 to vector<8x128xf32>
    %188 = arith.mulf %187, %186 : vector<8x128xf32>
    %cst_91 = arith.constant -1.45315206 : f32
    %189 = vector.broadcast %cst_91 : f32 to vector<8x128xf32>
    %190 = arith.addf %188, %189 : vector<8x128xf32>
    %191 = arith.mulf %190, %186 : vector<8x128xf32>
    %cst_92 = arith.constant 1.42141378 : f32
    %192 = vector.broadcast %cst_92 : f32 to vector<8x128xf32>
    %193 = arith.addf %191, %192 : vector<8x128xf32>
    %194 = arith.mulf %193, %186 : vector<8x128xf32>
    %cst_93 = arith.constant -0.284496725 : f32
    %195 = vector.broadcast %cst_93 : f32 to vector<8x128xf32>
    %196 = arith.addf %194, %195 : vector<8x128xf32>
    %197 = arith.mulf %196, %186 : vector<8x128xf32>
    %cst_94 = arith.constant 0.254829586 : f32
    %198 = vector.broadcast %cst_94 : f32 to vector<8x128xf32>
    %199 = arith.addf %197, %198 : vector<8x128xf32>
    %200 = arith.mulf %199, %186 : vector<8x128xf32>
    %cst_95 = arith.constant 0.000000e+00 : f32
    %201 = vector.broadcast %cst_95 : f32 to vector<8x128xf32>
    %202 = arith.subf %201, %181 : vector<8x128xf32>
    %203 = arith.mulf %202, %181 : vector<8x128xf32>
    %204 = math.exp %203 : vector<8x128xf32>
    %205 = arith.mulf %200, %204 : vector<8x128xf32>
    %cst_96 = arith.constant 1.000000e+00 : f32
    %206 = vector.broadcast %cst_96 : f32 to vector<8x128xf32>
    %207 = arith.subf %206, %205 : vector<8x128xf32>
    %208 = arith.mulf %180, %207 : vector<8x128xf32>
    %cst_97 = arith.constant 1.000000e+00 : f32
    %209 = vector.broadcast %cst_97 : f32 to vector<8x128xf32>
    %210 = arith.addf %209, %208 : vector<8x128xf32>
    %211 = arith.mulf %173, %210 : vector<8x128xf32>
    %212 = arith.truncf %211 : vector<8x128xf32> to vector<8x128xbf16>
    %c0_98 = arith.constant 0 : index
    %c0_99 = arith.constant 0 : index
    %c0_100 = arith.constant 0 : index
    %213 = vector.load %arg10[%c0_98, %c0_99, %c0_100] : memref<1x128x32xbf16, #tpu.memory_space<vmem>>, vector<1x128x32xbf16>
    %214 = vector.shape_cast %213 : vector<1x128x32xbf16> to vector<128x32xbf16>
    %cst_101 = arith.constant dense<0.000000e+00> : vector<8x32xf32>
    %215 = tpu.matmul %212, %214, %cst_101 {dimension_numbers = #tpu.dot_dimension_numbers<[1], [0], [0], [1], [0, 0, 1, 1], [], []>} : vector<8x128xbf16>, vector<128x32xbf16>, vector<8x32xf32> -> vector<8x32xf32>
    %216 = vector.shape_cast %15 : vector<32xf32> to vector<1x32xf32>
    %217 = vector.broadcast %216 : vector<1x32xf32> to vector<8x32xf32>
    %218 = arith.addf %215, %217 : vector<8x32xf32>
    %219 = arith.addf %138, %218 : vector<8x32xf32>
    %c0_102 = arith.constant 0 : index
    %c0_103 = arith.constant 0 : index
    %220 = vector.load %arg12[%c0_102, %c0_103] : memref<8x32xf32, #tpu.memory_space<vmem>>, vector<8x32xf32>
    tpu.vector_store %arg12[%c0_102, %c0_103], %219 {strides = array<i32>} : memref<8x32xf32, #tpu.memory_space<vmem>>, vector<8x32xf32>,
    %c1_i32 = arith.constant 1 : i32
    %221 = arith.cmpi eq, %arg1, %c1_i32 : i32
    %222 = arith.extui %221 : i1 to i32
    %c0_i32_104 = arith.constant 0 : i32
    %223 = arith.cmpi ne, %222, %c0_i32_104 : i32
    scf.if %223 {
      %c0_105 = arith.constant 0 : index
      %c0_106 = arith.constant 0 : index
      %224 = vector.load %arg3[%c0_105, %c0_106] : memref<2x32xf32, #tpu.memory_space<vmem>>, vector<1x32xf32>
      %225 = vector.shape_cast %224 : vector<1x32xf32> to vector<32xf32>
      %c1_107 = arith.constant 1 : index
      %c0_108 = arith.constant 0 : index
      %226 = vector.load %arg3[%c1_107, %c0_108] : memref<2x32xf32, #tpu.memory_space<vmem>>, vector<1x32xf32>
      %227 = vector.shape_cast %226 : vector<1x32xf32> to vector<32xf32>
      %cst_109 = arith.constant dense<0.000000e+00> : vector<8xf32>
      %228 = vector.multi_reduction <add>, %219, %cst_109 [1] : vector<8x32xf32> to vector<8xf32>
      %229 = vector.shape_cast %228 : vector<8xf32> to vector<8x1xf32>
      %cst_110 = arith.constant 3.200000e+01 : f32
      %230 = vector.broadcast %cst_110 : f32 to vector<8x1xf32>
      %231 = arith.divf %229, %230 : vector<8x1xf32>
      %232 = vector.broadcast %231 : vector<8x1xf32> to vector<8x32xf32>
      %233 = arith.subf %219, %232 : vector<8x32xf32>
      %234 = arith.mulf %233, %233 : vector<8x32xf32>
      %cst_111 = arith.constant dense<0.000000e+00> : vector<8xf32>
      %235 = vector.multi_reduction <add>, %234, %cst_111 [1] : vector<8x32xf32> to vector<8xf32>
      %236 = vector.shape_cast %235 : vector<8xf32> to vector<8x1xf32>
      %cst_112 = arith.constant 3.200000e+01 : f32
      %237 = vector.broadcast %cst_112 : f32 to vector<8x1xf32>
      %238 = arith.divf %236, %237 : vector<8x1xf32>
      %239 = vector.broadcast %231 : vector<8x1xf32> to vector<8x32xf32>
      %240 = arith.subf %219, %239 : vector<8x32xf32>
      %cst_113 = arith.constant 9.99999974E-6 : f32
      %241 = vector.broadcast %cst_113 : f32 to vector<8x1xf32>
      %242 = arith.addf %238, %241 : vector<8x1xf32>
      %243 = math.rsqrt %242 : vector<8x1xf32>
      %244 = vector.broadcast %243 : vector<8x1xf32> to vector<8x32xf32>
      %245 = arith.mulf %240, %244 : vector<8x32xf32>
      %246 = vector.shape_cast %225 : vector<32xf32> to vector<1x32xf32>
      %247 = vector.broadcast %246 : vector<1x32xf32> to vector<8x32xf32>
      %248 = arith.mulf %245, %247 : vector<8x32xf32>
      %249 = vector.shape_cast %227 : vector<32xf32> to vector<1x32xf32>
      %250 = vector.broadcast %249 : vector<1x32xf32> to vector<8x32xf32>
      %251 = arith.addf %248, %250 : vector<8x32xf32>
      %c0_114 = arith.constant 0 : index
      %c0_115 = arith.constant 0 : index
      %252 = vector.load %arg11[%c0_114, %c0_115] : memref<8x32xf32, #tpu.memory_space<vmem>>, vector<8x32xf32>
      tpu.vector_store %arg11[%c0_114, %c0_115], %251 {strides = array<i32>} : memref<8x32xf32, #tpu.memory_space<vmem>>, vector<8x32xf32>,
    } else {
    }
    return
  }
  func.func @transform_0(%arg0: i32, %arg1: i32) -> (i32, i32) {
    %c0_i32 = arith.constant 0 : i32
    %c0_i32_0 = arith.constant 0 : i32
    return %arg0, %c0_i32 : i32, i32
  }
  func.func @transform_1(%arg0: i32, %arg1: i32) -> (i32, i32) {
    %c0_i32 = arith.constant 0 : i32
    %c0_i32_0 = arith.constant 0 : i32
    %c0_i32_1 = arith.constant 0 : i32
    return %c0_i32, %c0_i32_0 : i32, i32
  }
  func.func @transform_2(%arg0: i32, %arg1: i32) -> (i32, i32, i32) {
    %c0_i32 = arith.constant 0 : i32
    %c0_i32_0 = arith.constant 0 : i32
    %c0_i32_1 = arith.constant 0 : i32
    return %arg1, %c0_i32, %c0_i32_0 : i32, i32, i32
  }
  func.func @transform_3(%arg0: i32, %arg1: i32) -> (i32, i32, i32) {
    %c0_i32 = arith.constant 0 : i32
    %c0_i32_0 = arith.constant 0 : i32
    %c0_i32_1 = arith.constant 0 : i32
    return %arg1, %c0_i32, %c0_i32_0 : i32, i32, i32
  }
  func.func @transform_4(%arg0: i32, %arg1: i32) -> (i32, i32, i32) {
    %c0_i32 = arith.constant 0 : i32
    %c0_i32_0 = arith.constant 0 : i32
    %c0_i32_1 = arith.constant 0 : i32
    return %arg1, %c0_i32, %c0_i32_0 : i32, i32, i32
  }
  func.func @transform_5(%arg0: i32, %arg1: i32) -> (i32, i32, i32) {
    %c0_i32 = arith.constant 0 : i32
    %c0_i32_0 = arith.constant 0 : i32
    %c0_i32_1 = arith.constant 0 : i32
    return %arg1, %c0_i32, %c0_i32_0 : i32, i32, i32
  }
  func.func @transform_6(%arg0: i32, %arg1: i32) -> (i32, i32, i32) {
    %c0_i32 = arith.constant 0 : i32
    %c0_i32_0 = arith.constant 0 : i32
    %c0_i32_1 = arith.constant 0 : i32
    return %arg1, %c0_i32, %c0_i32_0 : i32, i32, i32
  }
  func.func @transform_7(%arg0: i32, %arg1: i32) -> (i32, i32, i32) {
    %c0_i32 = arith.constant 0 : i32
    %c0_i32_0 = arith.constant 0 : i32
    %c0_i32_1 = arith.constant 0 : i32
    return %arg1, %c0_i32, %c0_i32_0 : i32, i32, i32
  }
  func.func @transform_8(%arg0: i32, %arg1: i32) -> (i32, i32, i32) {
    %c0_i32 = arith.constant 0 : i32
    %c0_i32_0 = arith.constant 0 : i32
    %c0_i32_1 = arith.constant 0 : i32
    return %arg1, %c0_i32, %c0_i32_0 : i32, i32, i32
  }
  func.func @transform_9(%arg0: i32, %arg1: i32) -> (i32, i32) {
    %c0_i32 = arith.constant 0 : i32
    %c0_i32_0 = arith.constant 0 : i32
    return %arg0, %c0_i32 : i32, i32
  }
}

</mosaic_0001>

<llo_original>
// kernel: latent_transformer_forward.1
$region0: #{latent_transformer_forward.1}
  #allocation0 [shape = 'u32[]', space=smem, size = 0x4, offset = 0x4, fixed_abs, tag = 'smem constant byte address 0x4 - core index']
  #allocation1 [shape = 'u32[144,128]{1,0:T(1,128)}', space=vmem, size = 0x12000, scoped, tag = 'internal scratch']
  #allocation2 [shape = 'f32[8,32]{1,0:T(8,128)}', space=vmem, size = 0x1000, scoped, tag = 'scratch operand']
  #allocation3 [shape = 'f32[8,96]{1,0:T(8,128)}', space=vmem, size = 0x1000, scoped, tag = 'scratch operand']
  #allocation4 [shape = 'f32[8,32]{1,0:T(8,128)}', space=vmem, size = 0x1000, scoped, tag = 'scratch operand']
  %s0 = inlined_call_operand.vmem [shape: f32[16,32], index: 0, kind: input, shape index: {}]
  %s1 = inlined_call_operand.vmem [shape: f32[2,32], index: 1, kind: input, shape index: {}]
  %s2 = inlined_call_operand.vmem [shape: f32[2,6,32], index: 2, kind: input, shape index: {}]
  %s3 = inlined_call_operand.vmem [shape: f32[2,1,96], index: 3, kind: input, shape index: {}]
  %s4 = inlined_call_operand.vmem [shape: f32[2,1,128], index: 4, kind: input, shape index: {}]
  %s5 = inlined_call_operand.vmem [shape: bf16[2,32,96], index: 5, kind: input, shape index: {}]
  %s6 = inlined_call_operand.vmem [shape: bf16[2,32,32], index: 6, kind: input, shape index: {}]
  %s7 = inlined_call_operand.vmem [shape: bf16[2,32,128], index: 7, kind: input, shape index: {}]
  %s8 = inlined_call_operand.vmem [shape: bf16[2,128,32], index: 8, kind: input, shape index: {}]
  %s9 = inlined_call_operand.hbm [shape: f32[16,32], index: 9, kind: output, shape index: {}]
  %s10 = sld [smem:[#allocation0]]
  $region77: #{latent_transformer_forward.1} parent=0
    _
  %s12 = ssub.s32 1, %s10
  %s13 = scalar_select 0, %s12, %s10
  $region1: #{latent_transformer_forward.1} parent=0
    #allocation5 [shape = 'u8[8192]{0}', space=vmem, size = 0x2000, scoped, tag = 'output window, operand 0']
    #allocation6 [shape = 's32[2]{0}', space=sflag, size = 0x8, scoped, tag = 'scoped memory for latent_transformer_forward.1']
    %14 = vsyncpa [#allocation6], 0
    %s15 = scalar_lea.sflag [#allocation6], 1
    %16 = vsyncpa %s15, 0
    loop: start=0, step=1, limit=6
    $region2: #{latent_transformer_forward.1} parent=1 // loop_pre_header
      _
    $region3: #{latent_transformer_forward.1} parent=1 // loop_header
      %s18 = sphi 0, %s22
      %p19 = scmp.ge.s32.totalorder %s18, 6
      %s25 = sphi 0, %s37
      %s26 = sphi 0, %s33
      %s27 = sphi 0, %s25
      %s28 = sphi 0, %s26
      %s29 = sphi 0, %s27
      %s30 = sphi 0, %s28
      %s40 = sphi 0, %s42
      %s43 = sphi 0, %s40
      %s44 = sphi 0, %s43
      %s60 = sphi 0, %s44
      %s64 = sphi 0, %s64
      %s66 = sphi 0, %s64
      %s67 = sphi 0, %s66
      %s81 = sphi 0, %s67
      %s87 = sphi 0, %s89
      %s90 = sphi 0, %s87
      %s91 = sphi 0, %s90
      %s107 = sphi 0, %s91
      %s113 = sphi 0, %s115
      %s116 = sphi 0, %s113
      %s117 = sphi 0, %s116
      %s133 = sphi 0, %s117
      %s139 = sphi 0, %s141
      %s142 = sphi 0, %s139
      %s143 = sphi 0, %s142
      %s159 = sphi 0, %s143
      %s165 = sphi 0, %s167
      %s168 = sphi 0, %s165
      %s169 = sphi 0, %s168
      %s185 = sphi 0, %s169
      %s191 = sphi 0, %s193
      %s194 = sphi 0, %s191
      %s195 = sphi 0, %s194
      %s211 = sphi 0, %s195
      %s217 = sphi 0, %s219
      %s220 = sphi 0, %s217
      %s221 = sphi 0, %s220
      %s237 = sphi 0, %s221
      %s243 = sphi 0, %s245
      %s246 = sphi 0, %s243
      %s247 = sphi 0, %s246
      %s263 = sphi 0, %s247
      %s269 = sphi 0, %s271
      %s272 = sphi 0, %s269
      %s273 = sphi 0, %s272
      %s289 = sphi 0, %s273
    $region4: #{latent_transformer_forward.1} parent=1 // loop_header_branch
      %21 = sbr.rel (%p19) target = $region8
    $region5: #{latent_transformer_forward.1} parent=1 // loop_body
      %s23 = ssub.s32 %s18, 1
      %s24 = ssub.s32 %s18, 2
      %s31 = sadd.s32 1, %s26
      %p32 = scmp.ge.s32.totalorder %s31, 2
      %s33 = scalar_select %p32, 0, %s31
      %s34 = sadd.s32 1, %s25
      %s35 = scalar_select %p32, %s34, %s25
      %p36 = scmp.ge.s32.totalorder %s35, 2
      %s37 = scalar_select %p36, 0, %s35
      %s38 = ssub.s32 %s25, %s37
      %p39 = scmp.eq.s32.totalorder %s38, 0
      %s41 = sadd.s32 %s40, 1
      %s42 = scalar_select %p39, %s40, %s41
      %p45 = pneg %p39
      %p46 = scmp.eq.s32.totalorder %s18, 3
      %p47 = por %p45, %p46
      %p48 = scmp.ne.s32.totalorder %s40, %s43
      %p49 = scmp.eq.s32.totalorder %s18, 0
      %p50 = por %p48, %p49
      %p51 = scmp.ne.s32.totalorder %s40, %s43
      %p52 = scmp.eq.s32.totalorder %s23, 3
      %p53 = por %p51, %p52
      %p54 = scmp.ne.s32.totalorder %s43, %s44
      %p55 = scmp.eq.s32.totalorder %s23, 0
      %p56 = por %p54, %p55
      %p57 = scmp.ne.s32.totalorder %s43, %s44
      %p58 = scmp.eq.s32.totalorder %s24, 3
      %p59 = por %p57, %p58
      %p61 = scmp.ne.s32.totalorder %s44, %s60
      %p62 = scmp.eq.s32.totalorder %s24, 0
      %p63 = por %p61, %p62
      %s65 = sadd.s32 %s64, 1
      %p68 = scmp.eq.s32.totalorder %s18, 3
      %p69 = scmp.ne.s32.totalorder %s64, %s66
      %p70 = scmp.eq.s32.totalorder %s18, 0
      %p71 = por %p69, %p70
      %p72 = scmp.ne.s32.totalorder %s64, %s66
      %p73 = scmp.eq.s32.totalorder %s23, 3
      %p74 = por %p72, %p73
      %p75 = scmp.ne.s32.totalorder %s66, %s67
      %p76 = scmp.eq.s32.totalorder %s23, 0
      %p77 = por %p75, %p76
      %p78 = scmp.ne.s32.totalorder %s66, %s67
      %p79 = scmp.eq.s32.totalorder %s24, 3
      %p80 = por %p78, %p79
      %p82 = scmp.ne.s32.totalorder %s67, %s81
      %p83 = scmp.eq.s32.totalorder %s24, 0
      %p84 = por %p82, %p83
      %s85 = ssub.s32 %s26, %s33
      %p86 = scmp.eq.s32.totalorder %s85, 0
      %s88 = sadd.s32 %s87, 1
      %s89 = scalar_select %p86, %s87, %s88
      %p92 = pneg %p86
      %p93 = scmp.eq.s32.totalorder %s18, 3
      %p94 = por %p92, %p93
      %p95 = scmp.ne.s32.totalorder %s87, %s90
      %p96 = scmp.eq.s32.totalorder %s18, 0
      %p97 = por %p95, %p96
      %p98 = scmp.ne.s32.totalorder %s87, %s90
      %p99 = scmp.eq.s32.totalorder %s23, 3
      %p100 = por %p98, %p99
      %p101 = scmp.ne.s32.totalorder %s90, %s91
      %p102 = scmp.eq.s32.totalorder %s23, 0
      %p103 = por %p101, %p102
      %p104 = scmp.ne.s32.totalorder %s90, %s91
      %p105 = scmp.eq.s32.totalorder %s24, 3
      %p106 = por %p104, %p105
      %p108 = scmp.ne.s32.totalorder %s91, %s107
      %p109 = scmp.eq.s32.totalorder %s24, 0
      %p110 = por %p108, %p109
      %s111 = ssub.s32 %s26, %s33
      %p112 = scmp.eq.s32.totalorder %s111, 0
      %s114 = sadd.s32 %s113, 1
      %s115 = scalar_select %p112, %s113, %s114
      %p118 = pneg %p112
      %p119 = scmp.eq.s32.totalorder %s18, 3
      %p120 = por %p118, %p119
      %p121 = scmp.ne.s32.totalorder %s113, %s116
      %p122 = scmp.eq.s32.totalorder %s18, 0
      %p123 = por %p121, %p122
      %p124 = scmp.ne.s32.totalorder %s113, %s116
      %p125 = scmp.eq.s32.totalorder %s23, 3
      %p126 = por %p124, %p125
      %p127 = scmp.ne.s32.totalorder %s116, %s117
      %p128 = scmp.eq.s32.totalorder %s23, 0
      %p129 = por %p127, %p128
      %p130 = scmp.ne.s32.totalorder %s116, %s117
      %p131 = scmp.eq.s32.totalorder %s24, 3
      %p132 = por %p130, %p131
      %p134 = scmp.ne.s32.totalorder %s117, %s133
      %p135 = scmp.eq.s32.totalorder %s24, 0
      %p136 = por %p134, %p135
      %s137 = ssub.s32 %s26, %s33
      %p138 = scmp.eq.s32.totalorder %s137, 0
      %s140 = sadd.s32 %s139, 1
      %s141 = scalar_select %p138, %s139, %s140
      %p144 = pneg %p138
      %p145 = scmp.eq.s32.totalorder %s18, 3
      %p146 = por %p144, %p145
      %p147 = scmp.ne.s32.totalorder %s139, %s142
      %p148 = scmp.eq.s32.totalorder %s18, 0
      %p149 = por %p147, %p148
      %p150 = scmp.ne.s32.totalorder %s139, %s142
      %p151 = scmp.eq.s32.totalorder %s23, 3
      %p152 = por %p150, %p151
      %p153 = scmp.ne.s32.totalorder %s142, %s143
      %p154 = scmp.eq.s32.totalorder %s23, 0
      %p155 = por %p153, %p154
      %p156 = scmp.ne.s32.totalorder %s142, %s143
      %p157 = scmp.eq.s32.totalorder %s24, 3
      %p158 = por %p156, %p157
      %p160 = scmp.ne.s32.totalorder %s143, %s159
      %p161 = scmp.eq.s32.totalorder %s24, 0
      %p162 = por %p160, %p161
      %s163 = ssub.s32 %s26, %s33
      %p164 = scmp.eq.s32.totalorder %s163, 0
      %s166 = sadd.s32 %s165, 1
      %s167 = scalar_select %p164, %s165, %s166
      %p170 = pneg %p164
      %p171 = scmp.eq.s32.totalorder %s18, 3
      %p172 = por %p170, %p171
      %p173 = scmp.ne.s32.totalorder %s165, %s168
      %p174 = scmp.eq.s32.totalorder %s18, 0
      %p175 = por %p173, %p174
      %p176 = scmp.ne.s32.totalorder %s165, %s168
      %p177 = scmp.eq.s32.totalorder %s23, 3
      %p178 = por %p176, %p177
      %p179 = scmp.ne.s32.totalorder %s168, %s169
      %p180 = scmp.eq.s32.totalorder %s23, 0
      %p181 = por %p179, %p180
      %p182 = scmp.ne.s32.totalorder %s168, %s169
      %p183 = scmp.eq.s32.totalorder %s24, 3
      %p184 = por %p182, %p183
      %p186 = scmp.ne.s32.totalorder %s169, %s185
      %p187 = scmp.eq.s32.totalorder %s24, 0
      %p188 = por %p186, %p187
      %s189 = ssub.s32 %s26, %s33
      %p190 = scmp.eq.s32.totalorder %s189, 0
      %s192 = sadd.s32 %s191, 1
      %s193 = scalar_select %p190, %s191, %s192
      %p196 = pneg %p190
      %p197 = scmp.eq.s32.totalorder %s18, 3
      %p198 = por %p196, %p197
      %p199 = scmp.ne.s32.totalorder %s191, %s194
      %p200 = scmp.eq.s32.totalorder %s18, 0
      %p201 = por %p199, %p200
      %p202 = scmp.ne.s32.totalorder %s191, %s194
      %p203 = scmp.eq.s32.totalorder %s23, 3
      %p204 = por %p202, %p203
      %p205 = scmp.ne.s32.totalorder %s194, %s195
      %p206 = scmp.eq.s32.totalorder %s23, 0
      %p207 = por %p205, %p206
      %p208 = scmp.ne.s32.totalorder %s194, %s195
      %p209 = scmp.eq.s32.totalorder %s24, 3
      %p210 = por %p208, %p209
      %p212 = scmp.ne.s32.totalorder %s195, %s211
      %p213 = scmp.eq.s32.totalorder %s24, 0
      %p214 = por %p212, %p213
      %s215 = ssub.s32 %s26, %s33
      %p216 = scmp.eq.s32.totalorder %s215, 0
      %s218 = sadd.s32 %s217, 1
      %s219 = scalar_select %p216, %s217, %s218
      %p222 = pneg %p216
      %p223 = scmp.eq.s32.totalorder %s18, 3
      %p224 = por %p222, %p223
      %p225 = scmp.ne.s32.totalorder %s217, %s220
      %p226 = scmp.eq.s32.totalorder %s18, 0
      %p227 = por %p225, %p226
      %p228 = scmp.ne.s32.totalorder %s217, %s220
      %p229 = scmp.eq.s32.totalorder %s23, 3
      %p230 = por %p228, %p229
      %p231 = scmp.ne.s32.totalorder %s220, %s221
      %p232 = scmp.eq.s32.totalorder %s23, 0
      %p233 = por %p231, %p232
      %p234 = scmp.ne.s32.totalorder %s220, %s221
      %p235 = scmp.eq.s32.totalorder %s24, 3
      %p236 = por %p234, %p235
      %p238 = scmp.ne.s32.totalorder %s221, %s237
      %p239 = scmp.eq.s32.totalorder %s24, 0
      %p240 = por %p238, %p239
      %s241 = ssub.s32 %s26, %s33
      %p242 = scmp.eq.s32.totalorder %s241, 0
      %s244 = sadd.s32 %s243, 1
      %s245 = scalar_select %p242, %s243, %s244
      %p248 = pneg %p242
      %p249 = scmp.eq.s32.totalorder %s18, 3
      %p250 = por %p248, %p249
      %p251 = scmp.ne.s32.totalorder %s243, %s246
      %p252 = scmp.eq.s32.totalorder %s18, 0
      %p253 = por %p251, %p252
      %p254 = scmp.ne.s32.totalorder %s243, %s246
      %p255 = scmp.eq.s32.totalorder %s23, 3
      %p256 = por %p254, %p255
      %p257 = scmp.ne.s32.totalorder %s246, %s247
      %p258 = scmp.eq.s32.totalorder %s23, 0
      %p259 = por %p257, %p258
      %p260 = scmp.ne.s32.totalorder %s246, %s247
      %p261 = scmp.eq.s32.totalorder %s24, 3
      %p262 = por %p260, %p261
      %p264 = scmp.ne.s32.totalorder %s247, %s263
      %p265 = scmp.eq.s32.totalorder %s24, 0
      %p266 = por %p264, %p265
      %s267 = ssub.s32 %s25, %s37
      %p268 = scmp.eq.s32.totalorder %s267, 0
      %s270 = sadd.s32 %s269, 1
      %s271 = scalar_select %p268, %s269, %s270
      %p274 = pneg %p268
      %p275 = scmp.eq.s32.totalorder %s18, 3
      %p276 = por %p274, %p275
      %p277 = scmp.ne.s32.totalorder %s269, %s272
      %p278 = scmp.eq.s32.totalorder %s18, 0
      %p279 = por %p277, %p278
      %p280 = scmp.ne.s32.totalorder %s269, %s272
      %p281 = scmp.eq.s32.totalorder %s23, 3
      %p282 = por %p280, %p281
      %p283 = scmp.ne.s32.totalorder %s272, %s273
      %p284 = scmp.eq.s32.totalorder %s23, 0
      %p285 = por %p283, %p284
      %p286 = scmp.ne.s32.totalorder %s272, %s273
      %p287 = scmp.eq.s32.totalorder %s24, 3
      %p288 = por %p286, %p287
      %p290 = scmp.ne.s32.totalorder %s273, %s289
      %p291 = scmp.eq.s32.totalorder %s24, 0
      %p292 = por %p290, %p291
      %p293 = scmp.le.s32.totalorder 1, %s18
      %p294 = scmp.lt.s32.totalorder %s18, 5
      %p295 = pnand %p293, %p294
      %p296 = pneg %p295
      // Predicated region
      $region9: #{latent_transformer_forward.1} parent=5 // pred_check
        _
      $region10: #{latent_transformer_forward.1} parent=5 // pred_check_branch
        %298 = sbr.rel (%p295) target = $region12
      $region11: #{latent_transformer_forward.1} parent=5 // pred_region
        %s299 = ssub.s32 %s18, 1
        // Predicated region
        $region13: #{latent_transformer_forward.1} parent=11 // pred_check
          %p300 = pneg %p77
        $region14: #{latent_transformer_forward.1} parent=11 // pred_check_branch
          %302 = sbr.rel (%p300) target = $region16
        $region15: #{latent_transformer_forward.1} parent=11 // pred_region
          _
        $region16: #{latent_transformer_forward.1} parent=11 // pred_fallthru
          _
      $region12: #{latent_transformer_forward.1} parent=5 // pred_fallthru
        _
      %p303 = scmp.lt.s32.totalorder %s18, 4
      // Predicated region
      $region17: #{latent_transformer_forward.1} parent=5 // pred_check
        %p304 = pneg %p303
      $region18: #{latent_transformer_forward.1} parent=5 // pred_check_branch
        %306 = sbr.rel (%p304) target = $region20
      $region19: #{latent_transformer_forward.1} parent=5 // pred_region
        // Predicated region
        $region21: #{latent_transformer_forward.1} parent=19 // pred_check
          %p307 = pneg %p50
        $region22: #{latent_transformer_forward.1} parent=19 // pred_check_branch
          %309 = sbr.rel (%p307) target = $region24
        $region23: #{latent_transformer_forward.1} parent=19 // pred_region
          %p310 = scmp.lt.s32.totalorder %s25, 1
          %s311 = scalar_select %p310, %s25, 1
          %s312 = smul.addr %s311, 8
          %s313 = scalar_lea.vmem %s0, %s312
        $region24: #{latent_transformer_forward.1} parent=19 // pred_fallthru
          _
        // Predicated region
        $region25: #{latent_transformer_forward.1} parent=19 // pred_check
          %p314 = pneg %p97
        $region26: #{latent_transformer_forward.1} parent=19 // pred_check_branch
          %316 = sbr.rel (%p314) target = $region28
        $region27: #{latent_transformer_forward.1} parent=19 // pred_region
          %p317 = scmp.lt.s32.totalorder %s26, 1
          %s318 = scalar_select %p317, %s26, 1
          %s319 = smul.addr %s318, 8
          %s320 = scalar_lea.vmem %s2, %s319
        $region28: #{latent_transformer_forward.1} parent=19 // pred_fallthru
          _
        // Predicated region
        $region29: #{latent_transformer_forward.1} parent=19 // pred_check
          %p321 = pneg %p123
        $region30: #{latent_transformer_forward.1} parent=19 // pred_check_branch
          %323 = sbr.rel (%p321) target = $region32
        $region31: #{latent_transformer_forward.1} parent=19 // pred_region
          %p324 = scmp.lt.s32.totalorder %s26, 1
          %s325 = scalar_select %p324, %s26, 1
          %s326 = scalar_lea.vmem %s3, %s325
        $region32: #{latent_transformer_forward.1} parent=19 // pred_fallthru
          _
        // Predicated region
        $region33: #{latent_transformer_forward.1} parent=19 // pred_check
          %p327 = pneg %p149
        $region34: #{latent_transformer_forward.1} parent=19 // pred_check_branch
          %329 = sbr.rel (%p327) target = $region36
        $region35: #{latent_transformer_forward.1} parent=19 // pred_region
          %p330 = scmp.lt.s32.totalorder %s26, 1
          %s331 = scalar_select %p330, %s26, 1
          %s332 = scalar_lea.vmem %s4, %s331
        $region36: #{latent_transformer_forward.1} parent=19 // pred_fallthru
          _
        // Predicated region
        $region37: #{latent_transformer_forward.1} parent=19 // pred_check
          %p333 = pneg %p175
        $region38: #{latent_transformer_forward.1} parent=19 // pred_check_branch
          %335 = sbr.rel (%p333) target = $region40
        $region39: #{latent_transformer_forward.1} parent=19 // pred_region
          %p336 = scmp.lt.s32.totalorder %s26, 1
          %s337 = scalar_select %p336, %s26, 1
          %s338 = smul.addr %s337, 4
          %s339 = smul.addr %s338, 4
          %s340 = scalar_lea.vmem %s5, %s339
        $region40: #{latent_transformer_forward.1} parent=19 // pred_fallthru
          _
        // Predicated region
        $region41: #{latent_transformer_forward.1} parent=19 // pred_check
          %p341 = pneg %p201
        $region42: #{latent_transformer_forward.1} parent=19 // pred_check_branch
          %343 = sbr.rel (%p341) target = $region44
        $region43: #{latent_transformer_forward.1} parent=19 // pred_region
          %p344 = scmp.lt.s32.totalorder %s26, 1
          %s345 = scalar_select %p344, %s26, 1
          %s346 = smul.addr %s345, 4
          %s347 = smul.addr %s346, 4
          %s348 = scalar_lea.vmem %s6, %s347
        $region44: #{latent_transformer_forward.1} parent=19 // pred_fallthru
          _
        // Predicated region
        $region45: #{latent_transformer_forward.1} parent=19 // pred_check
          %p349 = pneg %p227
        $region46: #{latent_transformer_forward.1} parent=19 // pred_check_branch
          %351 = sbr.rel (%p349) target = $region48
        $region47: #{latent_transformer_forward.1} parent=19 // pred_region
          %p352 = scmp.lt.s32.totalorder %s26, 1
          %s353 = scalar_select %p352, %s26, 1
          %s354 = smul.addr %s353, 4
          %s355 = smul.addr %s354, 4
          %s356 = scalar_lea.vmem %s7, %s355
        $region48: #{latent_transformer_forward.1} parent=19 // pred_fallthru
          _
        // Predicated region
        $region49: #{latent_transformer_forward.1} parent=19 // pred_check
          %p357 = pneg %p253
        $region50: #{latent_transformer_forward.1} parent=19 // pred_check_branch
          %359 = sbr.rel (%p357) target = $region52
        $region51: #{latent_transformer_forward.1} parent=19 // pred_region
          %p360 = scmp.lt.s32.totalorder %s26, 1
          %s361 = scalar_select %p360, %s26, 1
          %s362 = smul.addr %s361, 16
          %s363 = smul.addr %s362, 4
          %s364 = scalar_lea.vmem %s8, %s363
        $region52: #{latent_transformer_forward.1} parent=19 // pred_fallthru
          _
      $region20: #{latent_transformer_forward.1} parent=5 // pred_fallthru
        _
      %p365 = scmp.le.s32.totalorder 1, %s18
      %p366 = scmp.lt.s32.totalorder %s18, 5
      %p367 = pnand %p365, %p366
      %p368 = pneg %p367
      // Predicated region
      $region53: #{latent_transformer_forward.1} parent=5 // pred_check
        _
      $region54: #{latent_transformer_forward.1} parent=5 // pred_check_branch
        %370 = sbr.rel (%p367) target = $region56
      $region55: #{latent_transformer_forward.1} parent=5 // pred_region
        %s371 = ssub.s32 %s18, 1
        %p372 = scmp.lt.s32.totalorder %s27, 1
        %s373 = scalar_select %p372, %s27, 1
        %s374 = smul.addr %s373, 8
        %s375 = scalar_lea.vmem %s0, %s374
        %p376 = pneg %p56
        %p377 = pneg %p53
        %p378 = pneg %p77
        %p379 = pneg %p74
        %p380 = scmp.lt.s32.totalorder %s28, 1
        %s381 = scalar_select %p380, %s28, 1
        %s382 = smul.addr %s381, 8
        %s383 = scalar_lea.vmem %s2, %s382
        %p384 = pneg %p103
        %p385 = pneg %p100
        %p386 = scmp.lt.s32.totalorder %s28, 1
        %s387 = scalar_select %p386, %s28, 1
        %s388 = scalar_lea.vmem %s3, %s387
        %p389 = pneg %p129
        %p390 = pneg %p126
        %p391 = scmp.lt.s32.totalorder %s28, 1
        %s392 = scalar_select %p391, %s28, 1
        %s393 = scalar_lea.vmem %s4, %s392
        %p394 = pneg %p155
        %p395 = pneg %p152
        %p396 = scmp.lt.s32.totalorder %s28, 1
        %s397 = scalar_select %p396, %s28, 1
        %s398 = smul.addr %s397, 4
        %s399 = smul.addr %s398, 4
        %s400 = scalar_lea.vmem %s5, %s399
        %p401 = pneg %p181
        %p402 = pneg %p178
        %p403 = scmp.lt.s32.totalorder %s28, 1
        %s404 = scalar_select %p403, %s28, 1
        %s405 = smul.addr %s404, 4
        %s406 = smul.addr %s405, 4
        %s407 = scalar_lea.vmem %s6, %s406
        %p408 = pneg %p207
        %p409 = pneg %p204
        %p410 = scmp.lt.s32.totalorder %s28, 1
        %s411 = scalar_select %p410, %s28, 1
        %s412 = smul.addr %s411, 4
        %s413 = smul.addr %s412, 4
        %s414 = scalar_lea.vmem %s7, %s413
        %p415 = pneg %p233
        %p416 = pneg %p230
        %p417 = scmp.lt.s32.totalorder %s28, 1
        %s418 = scalar_select %p417, %s28, 1
        %s419 = smul.addr %s418, 16
        %s420 = smul.addr %s419, 4
        %s421 = scalar_lea.vmem %s8, %s420
        %p422 = pneg %p259
        %p423 = pneg %p256
        %p424 = pneg %p285
        %p425 = pneg %p282
        %s426 = sand.u32 %s272, 1
        %s427 = scalar_lea.sflag [#allocation6], %s426
        %s428 = sand.u32 %s272, 1
        %s429 = smul.addr %s428, 8
        %s430 = scalar_lea.vmem [#allocation5], %s429
        %p431 = scmp.lt.s32.totalorder %s27, 1
        %s432 = scalar_select %p431, %s27, 1
        %s433 = smul.addr %s432, 8
        %s434 = scalar_lea.vmem %s0, %s433
        %p435 = scmp.lt.s32.totalorder %s28, 1
        %s436 = scalar_select %p435, %s28, 1
        %s437 = smul.addr %s436, 8
        %s438 = scalar_lea.vmem %s2, %s437
        %p439 = scmp.lt.s32.totalorder %s28, 1
        %s440 = scalar_select %p439, %s28, 1
        %s441 = scalar_lea.vmem %s3, %s440
        %p442 = scmp.lt.s32.totalorder %s28, 1
        %s443 = scalar_select %p442, %s28, 1
        %s444 = scalar_lea.vmem %s4, %s443
        %p445 = scmp.lt.s32.totalorder %s28, 1
        %s446 = scalar_select %p445, %s28, 1
        %s447 = smul.addr %s446, 4
        %s448 = smul.addr %s447, 4
        %s449 = scalar_lea.vmem %s5, %s448
        %p450 = scmp.lt.s32.totalorder %s28, 1
        %s451 = scalar_select %p450, %s28, 1
        %s452 = smul.addr %s451, 4
        %s453 = smul.addr %s452, 4
        %s454 = scalar_lea.vmem %s6, %s453
        %p455 = scmp.lt.s32.totalorder %s28, 1
        %s456 = scalar_select %p455, %s28, 1
        %s457 = smul.addr %s456, 4
        %s458 = smul.addr %s457, 4
        %s459 = scalar_lea.vmem %s7, %s458
        %p460 = scmp.lt.s32.totalorder %s28, 1
        %s461 = scalar_select %p460, %s28, 1
        %s462 = smul.addr %s461, 16
        %s463 = smul.addr %s462, 4
        %s464 = scalar_lea.vmem %s8, %s463
        %p466 = scmp.eq.s32.totalorder %s28, 0
        // Predicated region
        $region57: #{latent_transformer_forward.1} parent=55 // pred_check
          %p467 = pneg %p466
        $region58: #{latent_transformer_forward.1} parent=55 // pred_check_branch
          %469 = sbr.rel (%p467) target = $region60
        $region59: #{latent_transformer_forward.1} parent=55 // pred_region
          %v470 = vld [vmem:[%s434] sm:$0xff]
          %vm471 = vcmask 261120
          %472 = vst.msk [vmem:[#allocation2] sm:$0xff] %vm471, %v470
        $region60: #{latent_transformer_forward.1} parent=55 // pred_fallthru
          _
        %v473 = vld [vmem:[#allocation2] sm:$0xff]
        %v474 = vld [vmem:[%s438] sm:$0x1]
        %v475 = vld [vmem:[%s438 + $0x1] sm:$0x1]
        %v476 = vld [vmem:[%s438 + $0x2] sm:$0x1]
        %v477 = vld [vmem:[%s438 + $0x3] sm:$0x1]
        %v478 = vld [vmem:[%s438 + $0x4] sm:$0x1]
        %v479 = vld [vmem:[%s438 + $0x5] sm:$0x1]
        %vm480 = vcmask 261120
        %v481 = vsel %vm480, %v473, 0.0
        %482 = vadd.xlane.f32.xlu0 %v481
        %v483 = vpop.xlane.xlu0 %482
        %v484 = vrcp.pop 32.0
        %v485 = vmul.f32 %v483, %v484
        %v486 = vsub.f32 %v473, %v485
        %v487 = vmul.f32 %v486, %v486
        %v488 = vsel %vm480, %v487, 0.0
        %489 = vadd.xlane.f32.xlu0 %v488
        %v490 = vpop.xlane.xlu0 %489
        %v491 = vmul.f32 %v490, %v484
        %v492 = vadd.f32 %v491, 1e-05
        %v493 = vrsqrt.pop %v492
        %v494 = vmul.f32 %v486, %v493
        %v495 = vlaneseq
        %v496 = vshrl.u32 %v495, 7
        %v497 = vsub.s32 0, %v496
        %v498 = vrot.slane %v474, %v497
        %v499 = vmul.f32 %v494, %v498
        %v500 = vlaneseq
        %v501 = vshrl.u32 %v500, 7
        %v502 = vsub.s32 0, %v501
        %v503 = vrot.slane %v475, %v502
        %v504 = vadd.f32 %v499, %v503
        %v505 = vpack.c.bf16 %v504, %v504
        %v506 = vld [vmem:[%s449] sm:$0xf]
        %v507 = vld [vmem:[%s449 + $0x4] sm:$0xf]
        %v508 = vld [vmem:[%s449 + $0x8] sm:$0xf]
        %v509 = vld [vmem:[%s449 + $0xc] sm:$0xf]
        %v510 = vld [vmem:[%s441] sm:$0x1]
        %v512 = vlaneseq
        %v513 = vshrl.u32 %v512, 7
        %v514 = vsub.s32 0, %v513
        %v515 = vrot.slane %v510, %v514
        %v521 = vunpack.c.l.b16 %v506
        %v522 = vunpack.c.l.b16 %v507
        %v523 = vunpack.c.l.b16 %v508
        %v524 = vunpack.c.l.b16 %v509
        %v525 = vpack.c.b16 %v522, %v521
        %v526 = vpack.c.b16 %v524, %v523
        %v530 = vsel %vm480, %v505, 0
        %532 = vmatprep.subr.bf16.mxu0 0
        %533 = vmatpush1.bf16.msra.mxu0 %v525
        %534 = vmatprep.subr.bf16.mxu0 0
        %535 = vmatpush1.bf16.msra.mxu0 %v526
        %536 = vmatprep.subr.bf16.mxu0 0
        %537 = vmatpush1.bf16.msra.mxu0 0
        %538 = vmatprep.subr.bf16.mxu0 0
        %539 = vmatpush1.bf16.msra.mxu0 0
        %540 = vmatprep.subr.bf16.mxu0 0
        %541 = vmatpush1.bf16.msra.mxu0 0
        %542 = vmatprep.subr.bf16.mxu0 0
        %543 = vmatpush1.bf16.msra.mxu0 0
        %544 = vmatprep.subr.bf16.mxu0 0
        %545 = vmatpush1.bf16.msra.mxu0 0
        %546 = vmatprep.subr.bf16.mxu0 0
        %547 = vmatpush1.bf16.msra.mxu0 0
        %548 = vmatprep.subr.bf16.mxu0 0
        %549 = vmatpush1.bf16.msra.mxu0 0
        %550 = vmatprep.subr.bf16.mxu0 0
        %551 = vmatpush1.bf16.msra.mxu0 0
        %552 = vmatprep.subr.bf16.mxu0 0
        %553 = vmatpush1.bf16.msra.mxu0 0
        %554 = vmatprep.subr.bf16.mxu0 0
        %555 = vmatpush1.bf16.msra.mxu0 0
        %556 = vmatprep.subr.bf16.mxu0 0
        %557 = vmatpush1.bf16.msra.mxu0 0
        %558 = vmatprep.subr.bf16.mxu0 0
        %559 = vmatpush1.bf16.msra.mxu0 0
        %560 = vmatprep.subr.bf16.mxu0 0
        %561 = vmatpush1.bf16.msra.mxu0 0
        %562 = vmatprep.subr.bf16.mxu0 0
        %563 = vmatpush1.bf16.msra.mxu0 0
        %564 = vmatprep.mubr.bf16.mxu0 0
        %565 = vmatmul.mubr.bf16.gmra.mrb[0].mxu0 %v530
        %v566 = vpop.f32.mrb[0].mxu0
        %v567 = vadd.f32 %v515, %v566
        %v568 = vpop.f32.mrb[0].mxu0
        %v569 = vpop.f32.mrb[0].mxu0
        %v570 = vpop.f32.mrb[0].mxu0
        %571 = vdwg.mxu0
        %vm572 = vcmask 785408
        %573 = vst.msk [vmem:[#allocation3] sm:$0xff] %vm572, %v567
        %v574 = vld [vmem:[#allocation3] sm:$0xff]
        %576 = vrot.lane.b32.xlu0 %v574, 96
        %v577 = vpop.permute.xlu0 %576
        %vm578 = vcmask 64512
        %v579 = vsel %vm578, %v574, 0
        %v581 = vsel %vm578, %v577, 0
        %583 = vmatprep.subr.mxu0 0.0
        %584 = vmatpush1.xpose.msra.mxu0 %v581
        %585 = vmatprep.subr.mxu0 0.0
        %586 = vmatpush1.xpose.msra.mxu0 0.0
        %587 = vmatprep.subr.mxu0 0.0
        %588 = vmatpush1.xpose.msra.mxu0 0.0
        %589 = vmatprep.subr.mxu0 0.0
        %590 = vmatpush1.xpose.msra.mxu0 0.0
        %591 = vmatprep.subr.mxu0 0.0
        %592 = vmatpush1.xpose.msra.mxu0 0.0
        %593 = vmatprep.subr.mxu0 0.0
        %594 = vmatpush1.xpose.msra.mxu0 0.0
        %595 = vmatprep.subr.mxu0 0.0
        %596 = vmatpush1.xpose.msra.mxu0 0.0
        %597 = vmatprep.subr.mxu0 0.0
        %598 = vmatpush1.xpose.msra.mxu0 0.0
        %599 = vmatprep.subr.mxu0 0.0
        %600 = vmatpush1.xpose.msra.mxu0 0.0
        %601 = vmatprep.subr.mxu0 0.0
        %602 = vmatpush1.xpose.msra.mxu0 0.0
        %603 = vmatprep.subr.mxu0 0.0
        %604 = vmatpush1.xpose.msra.mxu0 0.0
        %605 = vmatprep.subr.mxu0 0.0
        %606 = vmatpush1.xpose.msra.mxu0 0.0
        %607 = vmatprep.subr.mxu0 0.0
        %608 = vmatpush1.xpose.msra.mxu0 0.0
        %609 = vmatprep.subr.mxu0 0.0
        %610 = vmatpush1.xpose.msra.mxu0 0.0
        %611 = vmatprep.subr.mxu0 0.0
        %612 = vmatpush1.xpose.msra.mxu0 0.0
        %613 = vmatprep.subr.mxu0 0.0
        %614 = vmatpush1.xpose.msra.mxu0 0.0
        %615 = vmatprep.subr.mxu0 0.0
        %616 = vmatpush1.xpose.msra.mxu0 0.0
        %617 = vmatprep.subr.mxu0 0.0
        %618 = vmatpush1.xpose.msra.mxu0 0.0
        %619 = vmatprep.subr.mxu0 0.0
        %620 = vmatpush1.xpose.msra.mxu0 0.0
        %621 = vmatprep.subr.mxu0 0.0
        %622 = vmatpush1.xpose.msra.mxu0 0.0
        %623 = vmatprep.subr.mxu0 0.0
        %624 = vmatpush1.xpose.msra.mxu0 0.0
        %625 = vmatprep.subr.mxu0 0.0
        %626 = vmatpush1.xpose.msra.mxu0 0.0
        %627 = vmatprep.subr.mxu0 0.0
        %628 = vmatpush1.xpose.msra.mxu0 0.0
        %629 = vmatprep.subr.mxu0 0.0
        %630 = vmatpush1.xpose.msra.mxu0 0.0
        %631 = vmatprep.subr.mxu0 0.0
        %632 = vmatpush1.xpose.msra.mxu0 0.0
        %633 = vmatprep.subr.mxu0 0.0
        %634 = vmatpush1.xpose.msra.mxu0 0.0
        %635 = vmatprep.subr.mxu0 0.0
        %636 = vmatpush1.xpose.msra.mxu0 0.0
        %637 = vmatprep.subr.mxu0 0.0
        %638 = vmatpush1.xpose.msra.mxu0 0.0
        %639 = vmatprep.subr.mxu0 0.0
        %640 = vmatpush1.xpose.msra.mxu0 0.0
        %641 = vmatprep.subr.mxu0 0.0
        %642 = vmatpush1.xpose.msra.mxu0 0.0
        %643 = vmatprep.subr.mxu0 0.0
        %644 = vmatpush1.xpose.msra.mxu0 0.0
        %645 = vmatprep.subr.mxu0 0.0
        %646 = vmatpush1.xpose.msra.mxu0 0.0
        %647 = vmatprep.mubr.f32.mxu0 0.0
        %648 = vmatmul.mubr.f32.gmra.mrb[0].mxu0 %v579
        %v649 = vpop.f32.mrb[0].mxu0
        %v650 = vadd.f32 0.0, %v649
        %v651 = vpop.f32.mrb[0].mxu0
        %652 = vdwg.mxu0
        %v653 = vsel %vm578, %v650, -inf
        %654 = vmax.xlane.f32.xlu0 %v653
        %v655 = vpop.xlane.xlu0 %654
        %v656 = vsub.f32 %v650, %v655
        %v657 = vmul.f32 %v656, 1.442695
        %v658 = vpow.pop %v657
        %v659 = vsel %vm578, %v658, 0.0
        %660 = vadd.xlane.f32.xlu0 %v659
        %v661 = vpop.xlane.xlu0 %660
        %v662 = vrcp.pop %v661
        %v663 = vmul.f32 %v658, %v662
        %664 = vrot.lane.b32.xlu0 %v574, 64
        %v665 = vpop.permute.xlu0 %664
        %v668 = vsel %vm578, %v663, 0
        %670 = vmatprep.subr.mxu0 0.0
        %671 = vmatpush1.msra.mxu0 %v665
        %672 = vmatprep.subr.mxu0 0.0
        %673 = vmatpush1.msra.mxu0 0.0
        %674 = vmatprep.subr.mxu0 0.0
        %675 = vmatpush1.msra.mxu0 0.0
        %676 = vmatprep.subr.mxu0 0.0
        %677 = vmatpush1.msra.mxu0 0.0
        %678 = vmatprep.subr.mxu0 0.0
        %679 = vmatpush1.msra.mxu0 0.0
        %680 = vmatprep.subr.mxu0 0.0
        %681 = vmatpush1.msra.mxu0 0.0
        %682 = vmatprep.subr.mxu0 0.0
        %683 = vmatpush1.msra.mxu0 0.0
        %684 = vmatprep.subr.mxu0 0.0
        %685 = vmatpush1.msra.mxu0 0.0
        %686 = vmatprep.subr.mxu0 0.0
        %687 = vmatpush1.msra.mxu0 0.0
        %688 = vmatprep.subr.mxu0 0.0
        %689 = vmatpush1.msra.mxu0 0.0
        %690 = vmatprep.subr.mxu0 0.0
        %691 = vmatpush1.msra.mxu0 0.0
        %692 = vmatprep.subr.mxu0 0.0
        %693 = vmatpush1.msra.mxu0 0.0
        %694 = vmatprep.subr.mxu0 0.0
        %695 = vmatpush1.msra.mxu0 0.0
        %696 = vmatprep.subr.mxu0 0.0
        %697 = vmatpush1.msra.mxu0 0.0
        %698 = vmatprep.subr.mxu0 0.0
        %699 = vmatpush1.msra.mxu0 0.0
        %700 = vmatprep.subr.mxu0 0.0
        %701 = vmatpush1.msra.mxu0 0.0
        %702 = vmatprep.subr.mxu0 0.0
        %703 = vmatpush1.msra.mxu0 0.0
        %704 = vmatprep.subr.mxu0 0.0
        %705 = vmatpush1.msra.mxu0 0.0
        %706 = vmatprep.subr.mxu0 0.0
        %707 = vmatpush1.msra.mxu0 0.0
        %708 = vmatprep.subr.mxu0 0.0
        %709 = vmatpush1.msra.mxu0 0.0
        %710 = vmatprep.subr.mxu0 0.0
        %711 = vmatpush1.msra.mxu0 0.0
        %712 = vmatprep.subr.mxu0 0.0
        %713 = vmatpush1.msra.mxu0 0.0
        %714 = vmatprep.subr.mxu0 0.0
        %715 = vmatpush1.msra.mxu0 0.0
        %716 = vmatprep.subr.mxu0 0.0
        %717 = vmatpush1.msra.mxu0 0.0
        %718 = vmatprep.subr.mxu0 0.0
        %719 = vmatpush1.msra.mxu0 0.0
        %720 = vmatprep.subr.mxu0 0.0
        %721 = vmatpush1.msra.mxu0 0.0
        %722 = vmatprep.subr.mxu0 0.0
        %723 = vmatpush1.msra.mxu0 0.0
        %724 = vmatprep.subr.mxu0 0.0
        %725 = vmatpush1.msra.mxu0 0.0
        %726 = vmatprep.subr.mxu0 0.0
        %727 = vmatpush1.msra.mxu0 0.0
        %728 = vmatprep.subr.mxu0 0.0
        %729 = vmatpush1.msra.mxu0 0.0
        %730 = vmatprep.subr.mxu0 0.0
        %731 = vmatpush1.msra.mxu0 0.0
        %732 = vmatprep.subr.mxu0 0.0
        %733 = vmatpush1.msra.mxu0 0.0
        %734 = vmatprep.mubr.f32.mxu0 0.0
        %735 = vmatmul.mubr.f32.gmra.mrb[0].mxu0 %v668
        %v736 = vpop.f32.mrb[0].mxu0
        %v737 = vadd.f32 0.0, %v736
        %v738 = vpop.f32.mrb[0].mxu0
        %739 = vdwg.mxu0
        %740 = vst.msk [vmem:[#allocation4] sm:$0xff] %vm578, %v737
        %v741 = vld [vmem:[#allocation3] sm:$0xff]
        %743 = vrot.lane.b32.xlu0 %v741, 120
        %v744 = vpop.permute.xlu0 %743
        %745 = vrot.lane.b32.xlu0 %v741, 88
        %v746 = vpop.permute.xlu0 %745
        %v747 = vsel %vm578, %v744, 0
        %v749 = vsel %vm578, %v746, 0
        %751 = vmatprep.subr.mxu0 0.0
        %752 = vmatpush1.xpose.msra.mxu0 %v749
        %753 = vmatprep.subr.mxu0 0.0
        %754 = vmatpush1.xpose.msra.mxu0 0.0
        %755 = vmatprep.subr.mxu0 0.0
        %756 = vmatpush1.xpose.msra.mxu0 0.0
        %757 = vmatprep.subr.mxu0 0.0
        %758 = vmatpush1.xpose.msra.mxu0 0.0
        %759 = vmatprep.subr.mxu0 0.0
        %760 = vmatpush1.xpose.msra.mxu0 0.0
        %761 = vmatprep.subr.mxu0 0.0
        %762 = vmatpush1.xpose.msra.mxu0 0.0
        %763 = vmatprep.subr.mxu0 0.0
        %764 = vmatpush1.xpose.msra.mxu0 0.0
        %765 = vmatprep.subr.mxu0 0.0
        %766 = vmatpush1.xpose.msra.mxu0 0.0
        %767 = vmatprep.subr.mxu0 0.0
        %768 = vmatpush1.xpose.msra.mxu0 0.0
        %769 = vmatprep.subr.mxu0 0.0
        %770 = vmatpush1.xpose.msra.mxu0 0.0
        %771 = vmatprep.subr.mxu0 0.0
        %772 = vmatpush1.xpose.msra.mxu0 0.0
        %773 = vmatprep.subr.mxu0 0.0
        %774 = vmatpush1.xpose.msra.mxu0 0.0
        %775 = vmatprep.subr.mxu0 0.0
        %776 = vmatpush1.xpose.msra.mxu0 0.0
        %777 = vmatprep.subr.mxu0 0.0
        %778 = vmatpush1.xpose.msra.mxu0 0.0
        %779 = vmatprep.subr.mxu0 0.0
        %780 = vmatpush1.xpose.msra.mxu0 0.0
        %781 = vmatprep.subr.mxu0 0.0
        %782 = vmatpush1.xpose.msra.mxu0 0.0
        %783 = vmatprep.subr.mxu0 0.0
        %784 = vmatpush1.xpose.msra.mxu0 0.0
        %785 = vmatprep.subr.mxu0 0.0
        %786 = vmatpush1.xpose.msra.mxu0 0.0
        %787 = vmatprep.subr.mxu0 0.0
        %788 = vmatpush1.xpose.msra.mxu0 0.0
        %789 = vmatprep.subr.mxu0 0.0
        %790 = vmatpush1.xpose.msra.mxu0 0.0
        %791 = vmatprep.subr.mxu0 0.0
        %792 = vmatpush1.xpose.msra.mxu0 0.0
        %793 = vmatprep.subr.mxu0 0.0
        %794 = vmatpush1.xpose.msra.mxu0 0.0
        %795 = vmatprep.subr.mxu0 0.0
        %796 = vmatpush1.xpose.msra.mxu0 0.0
        %797 = vmatprep.subr.mxu0 0.0
        %798 = vmatpush1.xpose.msra.mxu0 0.0
        %799 = vmatprep.subr.mxu0 0.0
        %800 = vmatpush1.xpose.msra.mxu0 0.0
        %801 = vmatprep.subr.mxu0 0.0
        %802 = vmatpush1.xpose.msra.mxu0 0.0
        %803 = vmatprep.subr.mxu0 0.0
        %804 = vmatpush1.xpose.msra.mxu0 0.0
        %805 = vmatprep.subr.mxu0 0.0
        %806 = vmatpush1.xpose.msra.mxu0 0.0
        %807 = vmatprep.subr.mxu0 0.0
        %808 = vmatpush1.xpose.msra.mxu0 0.0
        %809 = vmatprep.subr.mxu0 0.0
        %810 = vmatpush1.xpose.msra.mxu0 0.0
        %811 = vmatprep.subr.mxu0 0.0
        %812 = vmatpush1.xpose.msra.mxu0 0.0
        %813 = vmatprep.subr.mxu0 0.0
        %814 = vmatpush1.xpose.msra.mxu0 0.0
        %815 = vmatprep.mubr.f32.mxu0 0.0
        %816 = vmatmul.mubr.f32.gmra.mrb[0].mxu0 %v747
        %v817 = vpop.f32.mrb[0].mxu0
        %v818 = vadd.f32 0.0, %v817
        %v819 = vpop.f32.mrb[0].mxu0
        %820 = vdwg.mxu0
        %v821 = vsel %vm578, %v818, -inf
        %822 = vmax.xlane.f32.xlu0 %v821
        %v823 = vpop.xlane.xlu0 %822
        %v824 = vsub.f32 %v818, %v823
        %v825 = vmul.f32 %v824, 1.442695
        %v826 = vpow.pop %v825
        %v827 = vsel %vm578, %v826, 0.0
        %828 = vadd.xlane.f32.xlu0 %v827
        %v829 = vpop.xlane.xlu0 %828
        %v830 = vrcp.pop %v829
        %v831 = vmul.f32 %v826, %v830
        %832 = vrot.lane.b32.xlu0 %v741, 56
        %v833 = vpop.permute.xlu0 %832
        %v836 = vsel %vm578, %v831, 0
        %838 = vmatprep.subr.mxu0 0.0
        %839 = vmatpush1.msra.mxu0 %v833
        %840 = vmatprep.subr.mxu0 0.0
        %841 = vmatpush1.msra.mxu0 0.0
        %842 = vmatprep.subr.mxu0 0.0
        %843 = vmatpush1.msra.mxu0 0.0
        %844 = vmatprep.subr.mxu0 0.0
        %845 = vmatpush1.msra.mxu0 0.0
        %846 = vmatprep.subr.mxu0 0.0
        %847 = vmatpush1.msra.mxu0 0.0
        %848 = vmatprep.subr.mxu0 0.0
        %849 = vmatpush1.msra.mxu0 0.0
        %850 = vmatprep.subr.mxu0 0.0
        %851 = vmatpush1.msra.mxu0 0.0
        %852 = vmatprep.subr.mxu0 0.0
        %853 = vmatpush1.msra.mxu0 0.0
        %854 = vmatprep.subr.mxu0 0.0
        %855 = vmatpush1.msra.mxu0 0.0
        %856 = vmatprep.subr.mxu0 0.0
        %857 = vmatpush1.msra.mxu0 0.0
        %858 = vmatprep.subr.mxu0 0.0
        %859 = vmatpush1.msra.mxu0 0.0
        %860 = vmatprep.subr.mxu0 0.0
        %861 = vmatpush1.msra.mxu0 0.0
        %862 = vmatprep.subr.mxu0 0.0
        %863 = vmatpush1.msra.mxu0 0.0
        %864 = vmatprep.subr.mxu0 0.0
        %865 = vmatpush1.msra.mxu0 0.0
        %866 = vmatprep.subr.mxu0 0.0
        %867 = vmatpush1.msra.mxu0 0.0
        %868 = vmatprep.subr.mxu0 0.0
        %869 = vmatpush1.msra.mxu0 0.0
        %870 = vmatprep.subr.mxu0 0.0
        %871 = vmatpush1.msra.mxu0 0.0
        %872 = vmatprep.subr.mxu0 0.0
        %873 = vmatpush1.msra.mxu0 0.0
        %874 = vmatprep.subr.mxu0 0.0
        %875 = vmatpush1.msra.mxu0 0.0
        %876 = vmatprep.subr.mxu0 0.0
        %877 = vmatpush1.msra.mxu0 0.0
        %878 = vmatprep.subr.mxu0 0.0
        %879 = vmatpush1.msra.mxu0 0.0
        %880 = vmatprep.subr.mxu0 0.0
        %881 = vmatpush1.msra.mxu0 0.0
        %882 = vmatprep.subr.mxu0 0.0
        %883 = vmatpush1.msra.mxu0 0.0
        %884 = vmatprep.subr.mxu0 0.0
        %885 = vmatpush1.msra.mxu0 0.0
        %886 = vmatprep.subr.mxu0 0.0
        %887 = vmatpush1.msra.mxu0 0.0
        %888 = vmatprep.subr.mxu0 0.0
        %889 = vmatpush1.msra.mxu0 0.0
        %890 = vmatprep.subr.mxu0 0.0
        %891 = vmatpush1.msra.mxu0 0.0
        %892 = vmatprep.subr.mxu0 0.0
        %893 = vmatpush1.msra.mxu0 0.0
        %894 = vmatprep.subr.mxu0 0.0
        %895 = vmatpush1.msra.mxu0 0.0
        %896 = vmatprep.subr.mxu0 0.0
        %897 = vmatpush1.msra.mxu0 0.0
        %898 = vmatprep.subr.mxu0 0.0
        %899 = vmatpush1.msra.mxu0 0.0
        %900 = vmatprep.subr.mxu0 0.0
        %901 = vmatpush1.msra.mxu0 0.0
        %902 = vmatprep.mubr.f32.mxu0 0.0
        %903 = vmatmul.mubr.f32.gmra.mrb[0].mxu0 %v836
        %v904 = vpop.f32.mrb[0].mxu0
        %v905 = vadd.f32 0.0, %v904
        %v906 = vpop.f32.mrb[0].mxu0
        %907 = vdwg.mxu0
        %909 = vrot.lane.b32.xlu0 %v905, 8
        %v910 = vpop.permute.xlu0 %909
        %vm912 = vcmask 130112
        %913 = vst.msk [vmem:[#allocation4] sm:$0xff] %vm912, %v910
        %v914 = vld [vmem:[#allocation3] sm:$0xff]
        %916 = vrot.lane.b32.xlu0 %v914, 112
        %v917 = vpop.permute.xlu0 %916
        %918 = vrot.lane.b32.xlu0 %v914, 80
        %v919 = vpop.permute.xlu0 %918
        %v920 = vsel %vm578, %v917, 0
        %v922 = vsel %vm578, %v919, 0
        %924 = vmatprep.subr.mxu0 0.0
        %925 = vmatpush1.xpose.msra.mxu0 %v922
        %926 = vmatprep.subr.mxu0 0.0
        %927 = vmatpush1.xpose.msra.mxu0 0.0
        %928 = vmatprep.subr.mxu0 0.0
        %929 = vmatpush1.xpose.msra.mxu0 0.0
        %930 = vmatprep.subr.mxu0 0.0
        %931 = vmatpush1.xpose.msra.mxu0 0.0
        %932 = vmatprep.subr.mxu0 0.0
        %933 = vmatpush1.xpose.msra.mxu0 0.0
        %934 = vmatprep.subr.mxu0 0.0
        %935 = vmatpush1.xpose.msra.mxu0 0.0
        %936 = vmatprep.subr.mxu0 0.0
        %937 = vmatpush1.xpose.msra.mxu0 0.0
        %938 = vmatprep.subr.mxu0 0.0
        %939 = vmatpush1.xpose.msra.mxu0 0.0
        %940 = vmatprep.subr.mxu0 0.0
        %941 = vmatpush1.xpose.msra.mxu0 0.0
        %942 = vmatprep.subr.mxu0 0.0
        %943 = vmatpush1.xpose.msra.mxu0 0.0
        %944 = vmatprep.subr.mxu0 0.0
        %945 = vmatpush1.xpose.msra.mxu0 0.0
        %946 = vmatprep.subr.mxu0 0.0
        %947 = vmatpush1.xpose.msra.mxu0 0.0
        %948 = vmatprep.subr.mxu0 0.0
        %949 = vmatpush1.xpose.msra.mxu0 0.0
        %950 = vmatprep.subr.mxu0 0.0
        %951 = vmatpush1.xpose.msra.mxu0 0.0
        %952 = vmatprep.subr.mxu0 0.0
        %953 = vmatpush1.xpose.msra.mxu0 0.0
        %954 = vmatprep.subr.mxu0 0.0
        %955 = vmatpush1.xpose.msra.mxu0 0.0
        %956 = vmatprep.subr.mxu0 0.0
        %957 = vmatpush1.xpose.msra.mxu0 0.0
        %958 = vmatprep.subr.mxu0 0.0
        %959 = vmatpush1.xpose.msra.mxu0 0.0
        %960 = vmatprep.subr.mxu0 0.0
        %961 = vmatpush1.xpose.msra.mxu0 0.0
        %962 = vmatprep.subr.mxu0 0.0
        %963 = vmatpush1.xpose.msra.mxu0 0.0
        %964 = vmatprep.subr.mxu0 0.0
        %965 = vmatpush1.xpose.msra.mxu0 0.0
        %966 = vmatprep.subr.mxu0 0.0
        %967 = vmatpush1.xpose.msra.mxu0 0.0
        %968 = vmatprep.subr.mxu0 0.0
        %969 = vmatpush1.xpose.msra.mxu0 0.0
        %970 = vmatprep.subr.mxu0 0.0
        %971 = vmatpush1.xpose.msra.mxu0 0.0
        %972 = vmatprep.subr.mxu0 0.0
        %973 = vmatpush1.xpose.msra.mxu0 0.0
        %974 = vmatprep.subr.mxu0 0.0
        %975 = vmatpush1.xpose.msra.mxu0 0.0
        %976 = vmatprep.subr.mxu0 0.0
        %977 = vmatpush1.xpose.msra.mxu0 0.0
        %978 = vmatprep.subr.mxu0 0.0
        %979 = vmatpush1.xpose.msra.mxu0 0.0
        %980 = vmatprep.subr.mxu0 0.0
        %981 = vmatpush1.xpose.msra.mxu0 0.0
        %982 = vmatprep.subr.mxu0 0.0
        %983 = vmatpush1.xpose.msra.mxu0 0.0
        %984 = vmatprep.subr.mxu0 0.0
        %985 = vmatpush1.xpose.msra.mxu0 0.0
        %986 = vmatprep.subr.mxu0 0.0
        %987 = vmatpush1.xpose.msra.mxu0 0.0
        %988 = vmatprep.mubr.f32.mxu0 0.0
        %989 = vmatmul.mubr.f32.gmra.mrb[0].mxu0 %v920
        %v990 = vpop.f32.mrb[0].mxu0
        %v991 = vadd.f32 0.0, %v990
        %v992 = vpop.f32.mrb[0].mxu0
        %993 = vdwg.mxu0
        %v994 = vsel %vm578, %v991, -inf
        %995 = vmax.xlane.f32.xlu0 %v994
        %v996 = vpop.xlane.xlu0 %995
        %v997 = vsub.f32 %v991, %v996
        %v998 = vmul.f32 %v997, 1.442695
        %v999 = vpow.pop %v998
        %v1000 = vsel %vm578, %v999, 0.0
        %1001 = vadd.xlane.f32.xlu0 %v1000
        %v1002 = vpop.xlane.xlu0 %1001
        %v1003 = vrcp.pop %v1002
        %v1004 = vmul.f32 %v999, %v1003
        %1005 = vrot.lane.b32.xlu0 %v914, 48
        %v1006 = vpop.permute.xlu0 %1005
        %v1009 = vsel %vm578, %v1004, 0
        %1011 = vmatprep.subr.mxu0 0.0
        %1012 = vmatpush1.msra.mxu0 %v1006
        %1013 = vmatprep.subr.mxu0 0.0
        %1014 = vmatpush1.msra.mxu0 0.0
        %1015 = vmatprep.subr.mxu0 0.0
        %1016 = vmatpush1.msra.mxu0 0.0
        %1017 = vmatprep.subr.mxu0 0.0
        %1018 = vmatpush1.msra.mxu0 0.0
        %1019 = vmatprep.subr.mxu0 0.0
        %1020 = vmatpush1.msra.mxu0 0.0
        %1021 = vmatprep.subr.mxu0 0.0
        %1022 = vmatpush1.msra.mxu0 0.0
        %1023 = vmatprep.subr.mxu0 0.0
        %1024 = vmatpush1.msra.mxu0 0.0
        %1025 = vmatprep.subr.mxu0 0.0
        %1026 = vmatpush1.msra.mxu0 0.0
        %1027 = vmatprep.subr.mxu0 0.0
        %1028 = vmatpush1.msra.mxu0 0.0
        %1029 = vmatprep.subr.mxu0 0.0
        %1030 = vmatpush1.msra.mxu0 0.0
        %1031 = vmatprep.subr.mxu0 0.0
        %1032 = vmatpush1.msra.mxu0 0.0
        %1033 = vmatprep.subr.mxu0 0.0
        %1034 = vmatpush1.msra.mxu0 0.0
        %1035 = vmatprep.subr.mxu0 0.0
        %1036 = vmatpush1.msra.mxu0 0.0
        %1037 = vmatprep.subr.mxu0 0.0
        %1038 = vmatpush1.msra.mxu0 0.0
        %1039 = vmatprep.subr.mxu0 0.0
        %1040 = vmatpush1.msra.mxu0 0.0
        %1041 = vmatprep.subr.mxu0 0.0
        %1042 = vmatpush1.msra.mxu0 0.0
        %1043 = vmatprep.subr.mxu0 0.0
        %1044 = vmatpush1.msra.mxu0 0.0
        %1045 = vmatprep.subr.mxu0 0.0
        %1046 = vmatpush1.msra.mxu0 0.0
        %1047 = vmatprep.subr.mxu0 0.0
        %1048 = vmatpush1.msra.mxu0 0.0
        %1049 = vmatprep.subr.mxu0 0.0
        %1050 = vmatpush1.msra.mxu0 0.0
        %1051 = vmatprep.subr.mxu0 0.0
        %1052 = vmatpush1.msra.mxu0 0.0
        %1053 = vmatprep.subr.mxu0 0.0
        %1054 = vmatpush1.msra.mxu0 0.0
        %1055 = vmatprep.subr.mxu0 0.0
        %1056 = vmatpush1.msra.mxu0 0.0
        %1057 = vmatprep.subr.mxu0 0.0
        %1058 = vmatpush1.msra.mxu0 0.0
        %1059 = vmatprep.subr.mxu0 0.0
        %1060 = vmatpush1.msra.mxu0 0.0
        %1061 = vmatprep.subr.mxu0 0.0
        %1062 = vmatpush1.msra.mxu0 0.0
        %1063 = vmatprep.subr.mxu0 0.0
        %1064 = vmatpush1.msra.mxu0 0.0
        %1065 = vmatprep.subr.mxu0 0.0
        %1066 = vmatpush1.msra.mxu0 0.0
        %1067 = vmatprep.subr.mxu0 0.0
        %1068 = vmatpush1.msra.mxu0 0.0
        %1069 = vmatprep.subr.mxu0 0.0
        %1070 = vmatpush1.msra.mxu0 0.0
        %1071 = vmatprep.subr.mxu0 0.0
        %1072 = vmatpush1.msra.mxu0 0.0
        %1073 = vmatprep.subr.mxu0 0.0
        %1074 = vmatpush1.msra.mxu0 0.0
        %1075 = vmatprep.mubr.f32.mxu0 0.0
        %1076 = vmatmul.mubr.f32.gmra.mrb[0].mxu0 %v1009
        %v1077 = vpop.f32.mrb[0].mxu0
        %v1078 = vadd.f32 0.0, %v1077
        %v1079 = vpop.f32.mrb[0].mxu0
        %1080 = vdwg.mxu0
        %1082 = vrot.lane.b32.xlu0 %v1078, 16
        %v1083 = vpop.permute.xlu0 %1082
        %vm1085 = vcmask 195712
        %1086 = vst.msk [vmem:[#allocation4] sm:$0xff] %vm1085, %v1083
        %v1087 = vld [vmem:[#allocation3] sm:$0xff]
        %1089 = vrot.lane.b32.xlu0 %v1087, 104
        %v1090 = vpop.permute.xlu0 %1089
        %1091 = vrot.lane.b32.xlu0 %v1087, 72
        %v1092 = vpop.permute.xlu0 %1091
        %v1093 = vsel %vm578, %v1090, 0
        %v1095 = vsel %vm578, %v1092, 0
        %1097 = vmatprep.subr.mxu0 0.0
        %1098 = vmatpush1.xpose.msra.mxu0 %v1095
        %1099 = vmatprep.subr.mxu0 0.0
        %1100 = vmatpush1.xpose.msra.mxu0 0.0
        %1101 = vmatprep.subr.mxu0 0.0
        %1102 = vmatpush1.xpose.msra.mxu0 0.0
        %1103 = vmatprep.subr.mxu0 0.0
        %1104 = vmatpush1.xpose.msra.mxu0 0.0
        %1105 = vmatprep.subr.mxu0 0.0
        %1106 = vmatpush1.xpose.msra.mxu0 0.0
        %1107 = vmatprep.subr.mxu0 0.0
        %1108 = vmatpush1.xpose.msra.mxu0 0.0
        %1109 = vmatprep.subr.mxu0 0.0
        %1110 = vmatpush1.xpose.msra.mxu0 0.0
        %1111 = vmatprep.subr.mxu0 0.0
        %1112 = vmatpush1.xpose.msra.mxu0 0.0
        %1113 = vmatprep.subr.mxu0 0.0
        %1114 = vmatpush1.xpose.msra.mxu0 0.0
        %1115 = vmatprep.subr.mxu0 0.0
        %1116 = vmatpush1.xpose.msra.mxu0 0.0
        %1117 = vmatprep.subr.mxu0 0.0
        %1118 = vmatpush1.xpose.msra.mxu0 0.0
        %1119 = vmatprep.subr.mxu0 0.0
        %1120 = vmatpush1.xpose.msra.mxu0 0.0
        %1121 = vmatprep.subr.mxu0 0.0
        %1122 = vmatpush1.xpose.msra.mxu0 0.0
        %1123 = vmatprep.subr.mxu0 0.0
        %1124 = vmatpush1.xpose.msra.mxu0 0.0
        %1125 = vmatprep.subr.mxu0 0.0
        %1126 = vmatpush1.xpose.msra.mxu0 0.0
        %1127 = vmatprep.subr.mxu0 0.0
        %1128 = vmatpush1.xpose.msra.mxu0 0.0
        %1129 = vmatprep.subr.mxu0 0.0
        %1130 = vmatpush1.xpose.msra.mxu0 0.0
        %1131 = vmatprep.subr.mxu0 0.0
        %1132 = vmatpush1.xpose.msra.mxu0 0.0
        %1133 = vmatprep.subr.mxu0 0.0
        %1134 = vmatpush1.xpose.msra.mxu0 0.0
        %1135 = vmatprep.subr.mxu0 0.0
        %1136 = vmatpush1.xpose.msra.mxu0 0.0
        %1137 = vmatprep.subr.mxu0 0.0
        %1138 = vmatpush1.xpose.msra.mxu0 0.0
        %1139 = vmatprep.subr.mxu0 0.0
        %1140 = vmatpush1.xpose.msra.mxu0 0.0
        %1141 = vmatprep.subr.mxu0 0.0
        %1142 = vmatpush1.xpose.msra.mxu0 0.0
        %1143 = vmatprep.subr.mxu0 0.0
        %1144 = vmatpush1.xpose.msra.mxu0 0.0
        %1145 = vmatprep.subr.mxu0 0.0
        %1146 = vmatpush1.xpose.msra.mxu0 0.0
        %1147 = vmatprep.subr.mxu0 0.0
        %1148 = vmatpush1.xpose.msra.mxu0 0.0
        %1149 = vmatprep.subr.mxu0 0.0
        %1150 = vmatpush1.xpose.msra.mxu0 0.0
        %1151 = vmatprep.subr.mxu0 0.0
        %1152 = vmatpush1.xpose.msra.mxu0 0.0
        %1153 = vmatprep.subr.mxu0 0.0
        %1154 = vmatpush1.xpose.msra.mxu0 0.0
        %1155 = vmatprep.subr.mxu0 0.0
        %1156 = vmatpush1.xpose.msra.mxu0 0.0
        %1157 = vmatprep.subr.mxu0 0.0
        %1158 = vmatpush1.xpose.msra.mxu0 0.0
        %1159 = vmatprep.subr.mxu0 0.0
        %1160 = vmatpush1.xpose.msra.mxu0 0.0
        %1161 = vmatprep.mubr.f32.mxu0 0.0
        %1162 = vmatmul.mubr.f32.gmra.mrb[0].mxu0 %v1093
        %v1163 = vpop.f32.mrb[0].mxu0
        %v1164 = vadd.f32 0.0, %v1163
        %v1165 = vpop.f32.mrb[0].mxu0
        %1166 = vdwg.mxu0
        %v1167 = vsel %vm578, %v1164, -inf
        %1168 = vmax.xlane.f32.xlu0 %v1167
        %v1169 = vpop.xlane.xlu0 %1168
        %v1170 = vsub.f32 %v1164, %v1169
        %v1171 = vmul.f32 %v1170, 1.442695
        %v1172 = vpow.pop %v1171
        %v1173 = vsel %vm578, %v1172, 0.0
        %1174 = vadd.xlane.f32.xlu0 %v1173
        %v1175 = vpop.xlane.xlu0 %1174
        %v1176 = vrcp.pop %v1175
        %v1177 = vmul.f32 %v1172, %v1176
        %1178 = vrot.lane.b32.xlu0 %v1087, 40
        %v1179 = vpop.permute.xlu0 %1178
        %v1182 = vsel %vm578, %v1177, 0
        %1184 = vmatprep.subr.mxu0 0.0
        %1185 = vmatpush1.msra.mxu0 %v1179
        %1186 = vmatprep.subr.mxu0 0.0
        %1187 = vmatpush1.msra.mxu0 0.0
        %1188 = vmatprep.subr.mxu0 0.0
        %1189 = vmatpush1.msra.mxu0 0.0
        %1190 = vmatprep.subr.mxu0 0.0
        %1191 = vmatpush1.msra.mxu0 0.0
        %1192 = vmatprep.subr.mxu0 0.0
        %1193 = vmatpush1.msra.mxu0 0.0
        %1194 = vmatprep.subr.mxu0 0.0
        %1195 = vmatpush1.msra.mxu0 0.0
        %1196 = vmatprep.subr.mxu0 0.0
        %1197 = vmatpush1.msra.mxu0 0.0
        %1198 = vmatprep.subr.mxu0 0.0
        %1199 = vmatpush1.msra.mxu0 0.0
        %1200 = vmatprep.subr.mxu0 0.0
        %1201 = vmatpush1.msra.mxu0 0.0
        %1202 = vmatprep.subr.mxu0 0.0
        %1203 = vmatpush1.msra.mxu0 0.0
        %1204 = vmatprep.subr.mxu0 0.0
        %1205 = vmatpush1.msra.mxu0 0.0
        %1206 = vmatprep.subr.mxu0 0.0
        %1207 = vmatpush1.msra.mxu0 0.0
        %1208 = vmatprep.subr.mxu0 0.0
        %1209 = vmatpush1.msra.mxu0 0.0
        %1210 = vmatprep.subr.mxu0 0.0
        %1211 = vmatpush1.msra.mxu0 0.0
        %1212 = vmatprep.subr.mxu0 0.0
        %1213 = vmatpush1.msra.mxu0 0.0
        %1214 = vmatprep.subr.mxu0 0.0
        %1215 = vmatpush1.msra.mxu0 0.0
        %1216 = vmatprep.subr.mxu0 0.0
        %1217 = vmatpush1.msra.mxu0 0.0
        %1218 = vmatprep.subr.mxu0 0.0
        %1219 = vmatpush1.msra.mxu0 0.0
        %1220 = vmatprep.subr.mxu0 0.0
        %1221 = vmatpush1.msra.mxu0 0.0
        %1222 = vmatprep.subr.mxu0 0.0
        %1223 = vmatpush1.msra.mxu0 0.0
        %1224 = vmatprep.subr.mxu0 0.0
        %1225 = vmatpush1.msra.mxu0 0.0
        %1226 = vmatprep.subr.mxu0 0.0
        %1227 = vmatpush1.msra.mxu0 0.0
        %1228 = vmatprep.subr.mxu0 0.0
        %1229 = vmatpush1.msra.mxu0 0.0
        %1230 = vmatprep.subr.mxu0 0.0
        %1231 = vmatpush1.msra.mxu0 0.0
        %1232 = vmatprep.subr.mxu0 0.0
        %1233 = vmatpush1.msra.mxu0 0.0
        %1234 = vmatprep.subr.mxu0 0.0
        %1235 = vmatpush1.msra.mxu0 0.0
        %1236 = vmatprep.subr.mxu0 0.0
        %1237 = vmatpush1.msra.mxu0 0.0
        %1238 = vmatprep.subr.mxu0 0.0
        %1239 = vmatpush1.msra.mxu0 0.0
        %1240 = vmatprep.subr.mxu0 0.0
        %1241 = vmatpush1.msra.mxu0 0.0
        %1242 = vmatprep.subr.mxu0 0.0
        %1243 = vmatpush1.msra.mxu0 0.0
        %1244 = vmatprep.subr.mxu0 0.0
        %1245 = vmatpush1.msra.mxu0 0.0
        %1246 = vmatprep.subr.mxu0 0.0
        %1247 = vmatpush1.msra.mxu0 0.0
        %1248 = vmatprep.mubr.f32.mxu0 0.0
        %1249 = vmatmul.mubr.f32.gmra.mrb[0].mxu0 %v1182
        %v1250 = vpop.f32.mrb[0].mxu0
        %v1251 = vadd.f32 0.0, %v1250
        %v1252 = vpop.f32.mrb[0].mxu0
        %1253 = vdwg.mxu0
        %1255 = vrot.lane.b32.xlu0 %v1251, 24
        %v1256 = vpop.permute.xlu0 %1255
        %vm1258 = vcmask 261312
        %1259 = vst.msk [vmem:[#allocation4] sm:$0xff] %vm1258, %v1256
        %v1260 = vld [vmem:[#allocation4] sm:$0xff]
        %v1261 = vpack.c.bf16 %v1260, %v1260
        %v1262 = vld [vmem:[%s454] sm:$0xf]
        %v1263 = vld [vmem:[%s454 + $0x4] sm:$0xf]
        %v1264 = vld [vmem:[%s454 + $0x8] sm:$0xf]
        %v1265 = vld [vmem:[%s454 + $0xc] sm:$0xf]
        %v1266 = vlaneseq
        %v1267 = vshrl.u32 %v1266, 7
        %v1268 = vsub.s32 0, %v1267
        %v1269 = vrot.slane %v478, %v1268
        %v1274 = vunpack.c.l.b16 %v1262
        %v1275 = vunpack.c.l.b16 %v1263
        %v1276 = vunpack.c.l.b16 %v1264
        %v1277 = vunpack.c.l.b16 %v1265
        %v1278 = vpack.c.b16 %v1275, %v1274
        %v1279 = vpack.c.b16 %v1277, %v1276
        %v1283 = vsel %vm480, %v1261, 0
        %1285 = vmatprep.subr.bf16.mxu0 0
        %1286 = vmatpush1.bf16.msra.mxu0 %v1278
        %1287 = vmatprep.subr.bf16.mxu0 0
        %1288 = vmatpush1.bf16.msra.mxu0 %v1279
        %1289 = vmatprep.subr.bf16.mxu0 0
        %1290 = vmatpush1.bf16.msra.mxu0 0
        %1291 = vmatprep.subr.bf16.mxu0 0
        %1292 = vmatpush1.bf16.msra.mxu0 0
        %1293 = vmatprep.subr.bf16.mxu0 0
        %1294 = vmatpush1.bf16.msra.mxu0 0
        %1295 = vmatprep.subr.bf16.mxu0 0
        %1296 = vmatpush1.bf16.msra.mxu0 0
        %1297 = vmatprep.subr.bf16.mxu0 0
        %1298 = vmatpush1.bf16.msra.mxu0 0
        %1299 = vmatprep.subr.bf16.mxu0 0
        %1300 = vmatpush1.bf16.msra.mxu0 0
        %1301 = vmatprep.subr.bf16.mxu0 0
        %1302 = vmatpush1.bf16.msra.mxu0 0
        %1303 = vmatprep.subr.bf16.mxu0 0
        %1304 = vmatpush1.bf16.msra.mxu0 0
        %1305 = vmatprep.subr.bf16.mxu0 0
        %1306 = vmatpush1.bf16.msra.mxu0 0
        %1307 = vmatprep.subr.bf16.mxu0 0
        %1308 = vmatpush1.bf16.msra.mxu0 0
        %1309 = vmatprep.subr.bf16.mxu0 0
        %1310 = vmatpush1.bf16.msra.mxu0 0
        %1311 = vmatprep.subr.bf16.mxu0 0
        %1312 = vmatpush1.bf16.msra.mxu0 0
        %1313 = vmatprep.subr.bf16.mxu0 0
        %1314 = vmatpush1.bf16.msra.mxu0 0
        %1315 = vmatprep.subr.bf16.mxu0 0
        %1316 = vmatpush1.bf16.msra.mxu0 0
        %1317 = vmatprep.mubr.bf16.mxu0 0
        %1318 = vmatmul.mubr.bf16.gmra.mrb[0].mxu0 %v1283
        %v1319 = vpop.f32.mrb[0].mxu0
        %v1320 = vadd.f32 %v1269, %v1319
        %v1321 = vpop.f32.mrb[0].mxu0
        %v1322 = vpop.f32.mrb[0].mxu0
        %v1323 = vpop.f32.mrb[0].mxu0
        %1324 = vdwg.mxu0
        %v1325 = vadd.f32 %v473, %v1320
        %v1326 = vsel %vm480, %v1325, 0.0
        %1327 = vadd.xlane.f32.xlu0 %v1326
        %v1328 = vpop.xlane.xlu0 %1327
        %v1329 = vmul.f32 %v1328, %v484
        %v1330 = vsub.f32 %v1325, %v1329
        %v1331 = vmul.f32 %v1330, %v1330
        %v1332 = vsel %vm480, %v1331, 0.0
        %1333 = vadd.xlane.f32.xlu0 %v1332
        %v1334 = vpop.xlane.xlu0 %1333
        %v1335 = vmul.f32 %v1334, %v484
        %v1336 = vadd.f32 %v1335, 1e-05
        %v1337 = vrsqrt.pop %v1336
        %v1338 = vmul.f32 %v1330, %v1337
        %v1339 = vlaneseq
        %v1340 = vshrl.u32 %v1339, 7
        %v1341 = vsub.s32 0, %v1340
        %v1342 = vrot.slane %v476, %v1341
        %v1343 = vmul.f32 %v1338, %v1342
        %v1344 = vlaneseq
        %v1345 = vshrl.u32 %v1344, 7
        %v1346 = vsub.s32 0, %v1345
        %v1347 = vrot.slane %v477, %v1346
        %v1348 = vadd.f32 %v1343, %v1347
        %v1349 = vpack.c.bf16 %v1348, %v1348
        %v1350 = vld [vmem:[%s459] sm:$0xf]
        %v1351 = vld [vmem:[%s459 + $0x4] sm:$0xf]
        %v1352 = vld [vmem:[%s459 + $0x8] sm:$0xf]
        %v1353 = vld [vmem:[%s459 + $0xc] sm:$0xf]
        %v1354 = vld [vmem:[%s444] sm:$0x1]
        %v1356 = vlaneseq
        %v1357 = vshrl.u32 %v1356, 7
        %v1358 = vsub.s32 0, %v1357
        %v1359 = vrot.slane %v1354, %v1358
        %v1365 = vunpack.c.l.b16 %v1350
        %v1366 = vunpack.c.l.b16 %v1351
        %v1367 = vunpack.c.l.b16 %v1352
        %v1368 = vunpack.c.l.b16 %v1353
        %v1369 = vpack.c.b16 %v1366, %v1365
        %v1370 = vpack.c.b16 %v1368, %v1367
        %v1374 = vsel %vm480, %v1349, 0
        %1376 = vmatprep.subr.bf16.mxu0 0
        %1377 = vmatpush1.bf16.msra.mxu0 %v1369
        %1378 = vmatprep.subr.bf16.mxu0 0
        %1379 = vmatpush1.bf16.msra.mxu0 %v1370
        %1380 = vmatprep.subr.bf16.mxu0 0
        %1381 = vmatpush1.bf16.msra.mxu0 0
        %1382 = vmatprep.subr.bf16.mxu0 0
        %1383 = vmatpush1.bf16.msra.mxu0 0
        %1384 = vmatprep.subr.bf16.mxu0 0
        %1385 = vmatpush1.bf16.msra.mxu0 0
        %1386 = vmatprep.subr.bf16.mxu0 0
        %1387 = vmatpush1.bf16.msra.mxu0 0
        %1388 = vmatprep.subr.bf16.mxu0 0
        %1389 = vmatpush1.bf16.msra.mxu0 0
        %1390 = vmatprep.subr.bf16.mxu0 0
        %1391 = vmatpush1.bf16.msra.mxu0 0
        %1392 = vmatprep.subr.bf16.mxu0 0
        %1393 = vmatpush1.bf16.msra.mxu0 0
        %1394 = vmatprep.subr.bf16.mxu0 0
        %1395 = vmatpush1.bf16.msra.mxu0 0
        %1396 = vmatprep.subr.bf16.mxu0 0
        %1397 = vmatpush1.bf16.msra.mxu0 0
        %1398 = vmatprep.subr.bf16.mxu0 0
        %1399 = vmatpush1.bf16.msra.mxu0 0
        %1400 = vmatprep.subr.bf16.mxu0 0
        %1401 = vmatpush1.bf16.msra.mxu0 0
        %1402 = vmatprep.subr.bf16.mxu0 0
        %1403 = vmatpush1.bf16.msra.mxu0 0
        %1404 = vmatprep.subr.bf16.mxu0 0
        %1405 = vmatpush1.bf16.msra.mxu0 0
        %1406 = vmatprep.subr.bf16.mxu0 0
        %1407 = vmatpush1.bf16.msra.mxu0 0
        %1408 = vmatprep.mubr.bf16.mxu0 0
        %1409 = vmatmul.mubr.bf16.gmra.mrb[0].mxu0 %v1374
        %v1410 = vpop.f32.mrb[0].mxu0
        %v1411 = vadd.f32 %v1359, %v1410
        %v1412 = vpop.f32.mrb[0].mxu0
        %v1413 = vpop.f32.mrb[0].mxu0
        %v1414 = vpop.f32.mrb[0].mxu0
        %1415 = vdwg.mxu0
        %v1416 = vmul.f32 %v1411, 0.5
        %v1417 = vmul.f32 %v1411, 0.70710677
        %vm1418 = vcmp.lt.f32.partialorder %v1417, 0.0
        %v1419 = vsel %vm1418, -1.0, 1.0
        %v1420 = vand.u32 2147483647, %v1417
        %v1421 = vmul.f32 %v1420, 0.3275911
        %v1422 = vadd.f32 %v1421, 1.0
        %v1423 = vrcp.pop %v1422
        %v1424 = vmul.f32 %v1423, 1.0614054
        %v1425 = vadd.f32 %v1424, -1.4531521
        %v1426 = vmul.f32 %v1425, %v1423
        %v1427 = vadd.f32 %v1426, 1.4214138
        %v1428 = vmul.f32 %v1427, %v1423
        %v1429 = vadd.f32 %v1428, -0.28449672
        %v1430 = vmul.f32 %v1429, %v1423
        %v1431 = vadd.f32 %v1430, 0.2548296
        %v1432 = vmul.f32 %v1431, %v1423
        %v1433 = vsub.f32 0.0, %v1420
        %v1434 = vmul.f32 %v1433, %v1420
        %v1435 = vmul.f32 %v1434, 1.442695
        %v1436 = vpow.pop %v1435
        %v1437 = vmul.f32 %v1432, %v1436
        %v1438 = vsub.f32 1.0, %v1437
        %v1439 = vmul.f32 %v1419, %v1438
        %v1440 = vadd.f32 %v1439, 1.0
        %v1441 = vmul.f32 %v1416, %v1440
        %v1442 = vpack.c.bf16 %v1441, %v1441
        %v1443 = vld [vmem:[%s464] sm:$0xf]
        %v1444 = vld [vmem:[%s464 + $0x4] sm:$0xf]
        %v1445 = vld [vmem:[%s464 + $0x8] sm:$0xf]
        %v1446 = vld [vmem:[%s464 + $0xc] sm:$0xf]
        %v1447 = vld [vmem:[%s464 + $0x10] sm:$0xf]
        %v1448 = vld [vmem:[%s464 + $0x14] sm:$0xf]
        %v1449 = vld [vmem:[%s464 + $0x18] sm:$0xf]
        %v1450 = vld [vmem:[%s464 + $0x1c] sm:$0xf]
        %v1451 = vld [vmem:[%s464 + $0x20] sm:$0xf]
        %v1452 = vld [vmem:[%s464 + $0x24] sm:$0xf]
        %v1453 = vld [vmem:[%s464 + $0x28] sm:$0xf]
        %v1454 = vld [vmem:[%s464 + $0x2c] sm:$0xf]
        %v1455 = vld [vmem:[%s464 + $0x30] sm:$0xf]
        %v1456 = vld [vmem:[%s464 + $0x34] sm:$0xf]
        %v1457 = vld [vmem:[%s464 + $0x38] sm:$0xf]
        %v1458 = vld [vmem:[%s464 + $0x3c] sm:$0xf]
        %v1459 = vlaneseq
        %v1460 = vshrl.u32 %v1459, 7
        %v1461 = vsub.s32 0, %v1460
        %v1462 = vrot.slane %v479, %v1461
        %v1479 = vunpack.c.l.b16 %v1443
        %v1480 = vunpack.c.l.b16 %v1444
        %v1481 = vunpack.c.l.b16 %v1445
        %v1482 = vunpack.c.l.b16 %v1446
        %v1483 = vunpack.c.l.b16 %v1447
        %v1484 = vunpack.c.l.b16 %v1448
        %v1485 = vunpack.c.l.b16 %v1449
        %v1486 = vunpack.c.l.b16 %v1450
        %v1487 = vunpack.c.l.b16 %v1451
        %v1488 = vunpack.c.l.b16 %v1452
        %v1489 = vunpack.c.l.b16 %v1453
        %v1490 = vunpack.c.l.b16 %v1454
        %v1491 = vunpack.c.l.b16 %v1455
        %v1492 = vunpack.c.l.b16 %v1456
        %v1493 = vunpack.c.l.b16 %v1457
        %v1494 = vunpack.c.l.b16 %v1458
        %v1495 = vpack.c.b16 %v1480, %v1479
        %v1496 = vpack.c.b16 %v1482, %v1481
        %v1497 = vpack.c.b16 %v1484, %v1483
        %v1498 = vpack.c.b16 %v1486, %v1485
        %v1499 = vpack.c.b16 %v1488, %v1487
        %v1500 = vpack.c.b16 %v1490, %v1489
        %v1501 = vpack.c.b16 %v1492, %v1491
        %v1502 = vpack.c.b16 %v1494, %v1493
        %1511 = vmatprep.subr.bf16.mxu0 0
        %1512 = vmatpush1.bf16.msra.mxu0 %v1495
        %1513 = vmatprep.subr.bf16.mxu0 0
        %1514 = vmatpush1.bf16.msra.mxu0 %v1496
        %1515 = vmatprep.subr.bf16.mxu0 0
        %1516 = vmatpush1.bf16.msra.mxu0 %v1497
        %1517 = vmatprep.subr.bf16.mxu0 0
        %1518 = vmatpush1.bf16.msra.mxu0 %v1498
        %1519 = vmatprep.subr.bf16.mxu0 0
        %1520 = vmatpush1.bf16.msra.mxu0 %v1499
        %1521 = vmatprep.subr.bf16.mxu0 0
        %1522 = vmatpush1.bf16.msra.mxu0 %v1500
        %1523 = vmatprep.subr.bf16.mxu0 0
        %1524 = vmatpush1.bf16.msra.mxu0 %v1501
        %1525 = vmatprep.subr.bf16.mxu0 0
        %1526 = vmatpush1.bf16.msra.mxu0 %v1502
        %1527 = vmatprep.subr.bf16.mxu0 0
        %1528 = vmatpush1.bf16.msra.mxu0 0
        %1529 = vmatprep.subr.bf16.mxu0 0
        %1530 = vmatpush1.bf16.msra.mxu0 0
        %1531 = vmatprep.subr.bf16.mxu0 0
        %1532 = vmatpush1.bf16.msra.mxu0 0
        %1533 = vmatprep.subr.bf16.mxu0 0
        %1534 = vmatpush1.bf16.msra.mxu0 0
        %1535 = vmatprep.subr.bf16.mxu0 0
        %1536 = vmatpush1.bf16.msra.mxu0 0
        %1537 = vmatprep.subr.bf16.mxu0 0
        %1538 = vmatpush1.bf16.msra.mxu0 0
        %1539 = vmatprep.subr.bf16.mxu0 0
        %1540 = vmatpush1.bf16.msra.mxu0 0
        %1541 = vmatprep.subr.bf16.mxu0 0
        %1542 = vmatpush1.bf16.msra.mxu0 0
        %1543 = vmatprep.mubr.bf16.mxu0 0
        %1544 = vmatmul.mubr.bf16.gmra.mrb[0].mxu0 %v1442
        %v1545 = vpop.f32.mrb[0].mxu0
        %v1546 = vadd.f32 %v1462, %v1545
        %v1547 = vpop.f32.mrb[0].mxu0
        %v1548 = vpop.f32.mrb[0].mxu0
        %v1549 = vpop.f32.mrb[0].mxu0
        %1550 = vdwg.mxu0
        %v1551 = vadd.f32 %v1325, %v1546
        %1552 = vst.msk [vmem:[#allocation2] sm:$0xff] %vm480, %v1551
        %p1553 = scmp.eq.s32.totalorder %s28, 1
        // Predicated region
        $region61: #{latent_transformer_forward.1} parent=55 // pred_check
          %p1554 = pneg %p1553
        $region62: #{latent_transformer_forward.1} parent=55 // pred_check_branch
          %1556 = sbr.rel (%p1554) target = $region64
        $region63: #{latent_transformer_forward.1} parent=55 // pred_region
          %v1557 = vld [vmem:[%s1] sm:$0x1]
          %v1558 = vld [vmem:[%s1 + $0x1] sm:$0x1]
          %v1559 = vsel %vm480, %v1551, 0.0
          %1560 = vadd.xlane.f32.xlu0 %v1559
          %v1561 = vpop.xlane.xlu0 %1560
          %v1562 = vmul.f32 %v1561, %v484
          %v1563 = vsub.f32 %v1551, %v1562
          %v1564 = vmul.f32 %v1563, %v1563
          %v1565 = vsel %vm480, %v1564, 0.0
          %1566 = vadd.xlane.f32.xlu0 %v1565
          %v1567 = vpop.xlane.xlu0 %1566
          %v1568 = vmul.f32 %v1567, %v484
          %v1569 = vadd.f32 %v1568, 1e-05
          %v1570 = vrsqrt.pop %v1569
          %v1571 = vmul.f32 %v1563, %v1570
          %v1572 = vlaneseq
          %v1573 = vshrl.u32 %v1572, 7
          %v1574 = vsub.s32 0, %v1573
          %v1575 = vrot.slane %v1557, %v1574
          %v1576 = vmul.f32 %v1571, %v1575
          %v1577 = vlaneseq
          %v1578 = vshrl.u32 %v1577, 7
          %v1579 = vsub.s32 0, %v1578
          %v1580 = vrot.slane %v1558, %v1579
          %v1581 = vadd.f32 %v1576, %v1580
          %1582 = vst.msk [vmem:[%s430] sm:$0xff] %vm480, %v1581
        $region64: #{latent_transformer_forward.1} parent=55 // pred_fallthru
          _
        %s1583 = sand.u32 %s272, 1
        %s1584 = scalar_lea.sflag [#allocation6], %s1583
        %s1585 = sand.u32 %s272, 1
        %s1586 = smul.addr %s1585, 8
        %s1587 = scalar_lea.vmem [#allocation5], %s1586
        // Predicated region
        $region65: #{latent_transformer_forward.1} parent=55 // pred_check
          %p1588 = pneg %p282
        $region66: #{latent_transformer_forward.1} parent=55 // pred_check_branch
          %1590 = sbr.rel (%p1588) target = $region68
        $region67: #{latent_transformer_forward.1} parent=55 // pred_region
          %s1592 = ssub.s32 128, 128
          %1593 = vsyncadd %s1584, %s1592
          %s1594 = smul.addr %s27, 128
          %s1595 = scalar_lea.hbm %s9, %s1594
          %s1597 = sshll.u32 %s1587, 4
          %s1598 = int_to_ptr.vmem [resolvable:$true] %s1597
          %1600 = dma.vmem_to_hbm [thread:$0]  %s1598, 128, %s1595, %s1584
        $region68: #{latent_transformer_forward.1} parent=55 // pred_fallthru
          _
      $region56: #{latent_transformer_forward.1} parent=5 // pred_fallthru
        _
      %p1601 = scmp.le.s32.totalorder 2, %s18
      // Predicated region
      $region69: #{latent_transformer_forward.1} parent=5 // pred_check
        %p1602 = pneg %p1601
      $region70: #{latent_transformer_forward.1} parent=5 // pred_check_branch
        %1604 = sbr.rel (%p1602) target = $region72
      $region71: #{latent_transformer_forward.1} parent=5 // pred_region
        %s1605 = ssub.s32 %s18, 2
        // Predicated region
        $region73: #{latent_transformer_forward.1} parent=71 // pred_check
          %p1606 = pneg %p288
        $region74: #{latent_transformer_forward.1} parent=71 // pred_check_branch
          %1608 = sbr.rel (%p1606) target = $region76
        $region75: #{latent_transformer_forward.1} parent=71 // pred_region
          %s1609 = sand.u32 %s273, 1
          %s1610 = scalar_lea.sflag [#allocation6], %s1609
          %s1611 = sand.u32 %s273, 1
          %s1612 = smul.addr %s1611, 8
          %s1613 = scalar_lea.vmem [#allocation5], %s1612
          %1614 = dma.done %s1610, 128
        $region76: #{latent_transformer_forward.1} parent=71 // pred_fallthru
          _
      $region72: #{latent_transformer_forward.1} parent=5 // pred_fallthru
        _
    $region6: #{latent_transformer_forward.1} parent=1 // loop_footer
      %s22 = sadd.s32 1, %s18
    $region7: #{latent_transformer_forward.1} parent=1 // loop_footer_branch
      %17 = sbr.rel target = $region3
    $region8: #{latent_transformer_forward.1} parent=1 // loop_exit
      _
    %1615 = vsyncpa [#allocation6], 1
    %s1616 = scalar_lea.sflag [#allocation6], 1
    %1617 = vsyncpa %s1616, 1

</llo_original>
